<compile_context>
chip_gen: v7x
topology: tpu7x:2x2x1
jax: 0.10.0
libtpu: 0.0.40
codegen_flags: <defaults>
</compile_context>

<pallas_src>
import math

import jax
import jax.numpy as jnp
from jax.experimental import pallas as pl
from jax.experimental.pallas import tpu as pltpu


def _round_up(x, m):
    return ((x + m - 1) // m) * m


# ------------------ Fused kernel: gather + recurrence + lm head ------------------ #
def _fused_rnn_kernel(idx_ref, wxe_ref, wh_ref, bxh_ref, wlm_ref, blm_ref,
                      h0_ref, out_ref, h_scratch):
    # idx_ref : (TC, Bp, 1) int32   token ids, time-major
    # wxe_ref : (Vp, Hp)  bf16/f32  wte @ W_x   (embedding folded into x-proj)
    # wh_ref  : (Hp, Hp)  bf16/f32
    # bxh_ref : (1, Hp)   f32
    # wlm_ref : (Hp, Vp)  bf16/f32
    # blm_ref : (1, Vp)   f32
    # h0_ref  : (Bp, Hp)  f32
    # out_ref : (Bp, TC, Vp) f32    logits, written batch-major
    # h_scratch: VMEM (Bp, Hp) f32  hidden state carried across time chunks
    @pl.when(pl.program_id(0) == 0)
    def _():
        h_scratch[...] = h0_ref[...]

    tc_steps = idx_ref.shape[0]
    bp = h0_ref.shape[0]
    vp = wxe_ref.shape[0]
    cdt = wh_ref.dtype                    # matmul operand dtype (bf16 or f32)

    # Loop-invariant operands: loaded once, stay resident in vregs/VMEM.
    wxe = wxe_ref[...]
    wh = wh_ref[...]
    wlm = wlm_ref[...]
    bxh = bxh_ref[...]
    blm = blm_ref[...]
    lane_ids = jax.lax.broadcasted_iota(jnp.int32, (bp, vp), 1)

    # TODO(synk): stage wh in the MXU across the unrolled time loop via
    #             pltpu.matmul_push_rhs / matmul_acc_lhs (hold-RHS pattern).
    def step(t, h):
        # Embedding gather + x-projection as one one-hot MXU matmul:
        #   x_t @ W_x == onehot(idx_t) @ (wte @ W_x)
        onehot = jnp.where(idx_ref[t] == lane_ids, 1.0, 0.0).astype(cdt)  # (Bp, Vp)
        xproj = jnp.dot(onehot, wxe, preferred_element_type=jnp.float32)  # (Bp, Hp)
        rec = jnp.dot(h.astype(cdt), wh, preferred_element_type=jnp.float32)
        h_new = jnp.tanh(xproj + rec + bxh)                               # f32
        logits = jnp.dot(h_new.astype(cdt), wlm,
                         preferred_element_type=jnp.float32) + blm        # (Bp, Vp)
        out_ref[:, t, :] = logits.astype(out_ref.dtype)
        return h_new

    h_final = jax.lax.fori_loop(0, tc_steps, step, h_scratch[...], unroll=True)
    h_scratch[...] = h_final


# --------------------------------- Forward ---------------------------------- #
def rnn_forward(idx, params, *, vocab_size, targets=None,
                matmul_dtype=jnp.bfloat16, time_chunk=None):
    """Reproduces RNN.forward (cell_type='rnn') semantics: (logits, loss)."""
    wte, start, w_x, w_h, b_xh, w_lm, b_lm = params
    B, T = idx.shape
    H = w_h.shape[0]
    V = vocab_size
    assert wte.shape[0] == V

    Bp = _round_up(B, 8)          # sublane-multiple batch
    Hp = _round_up(H, 128)        # lane-dense hidden width
    Vp = _round_up(V, 128)        # lane-dense vocab width
    TC = time_chunk if time_chunk is not None else min(16, _round_up(T, 8))
    T_pad = _round_up(T, TC)

    # Fold the embedding table into the x-projection (exact algebraic rewrite):
    #   x_t @ W_x = onehot(idx_t) @ (wte @ W_x)
    wxe = jnp.dot(wte, w_x)                                            # (V, H)
    wxe_p = jnp.pad(wxe, ((0, Vp - V), (0, Hp - H))).astype(matmul_dtype)
    wh_p = jnp.pad(w_h, ((0, Hp - H), (0, Hp - H))).astype(matmul_dtype)
    wlm_p = jnp.pad(w_lm, ((0, Hp - H), (0, Vp - V))).astype(matmul_dtype)
    bxh_p = jnp.pad(b_xh, ((0, 0), (0, Hp - H))).astype(jnp.float32)
    blm_p = jnp.pad(b_lm, ((0, 0), (0, Vp - V))).astype(jnp.float32)
    h0 = jnp.broadcast_to(jnp.pad(start, ((0, 0), (0, Hp - H))),
                          (Bp, Hp)).astype(jnp.float32)
    # Padded hidden columns stay exactly 0 through the recurrence:
    # tanh(0 + 0 + 0) = 0, and padded vocab columns of the logits are 0.

    # Token ids, time-major, padded to (T_pad, Bp, 1).  The trailing size-1
    # lane dim keeps the per-step read 2-D (Bp sublanes x 1 lane), so the
    # in-kernel one-hot needs no reshape/transpose.  Padded tokens are 0 and
    # their rows/timesteps are sliced off below.
    idx_tm = jnp.transpose(idx.astype(jnp.int32), (1, 0))
    idx_tm = jnp.pad(idx_tm, ((0, T_pad - T), (0, Bp - B)))
    idx3 = idx_tm[:, :, None]

    grid = (T_pad // TC,)
    logits_pad = pl.pallas_call(
        _fused_rnn_kernel,
        out_shape=jax.ShapeDtypeStruct((Bp, T_pad, Vp), jnp.float32),
        grid_spec=pltpu.PrefetchScalarGridSpec(
            num_scalar_prefetch=0,
            grid=grid,
            in_specs=[
                pl.BlockSpec((TC, Bp, 1), lambda c: (c, 0, 0)),
                # Constant-block-index weights below: fetched once, stay
                # resident across the sequential grid.
                # TODO(synk): single-buffer them via pipeline_mode=pl.Buffered(1)
                #             (and column-tile wh) once Hp is large enough to
                #             pressure v7x's 64 MiB VMEM.
                pl.BlockSpec((Vp, Hp), lambda c: (0, 0)),
                pl.BlockSpec((Hp, Hp), lambda c: (0, 0)),
                pl.BlockSpec((1, Hp), lambda c: (0, 0)),
                pl.BlockSpec((Hp, Vp), lambda c: (0, 0)),
                pl.BlockSpec((1, Vp), lambda c: (0, 0)),
                pl.BlockSpec((Bp, Hp), lambda c: (0, 0)),
            ],
            out_specs=pl.BlockSpec((Bp, TC, Vp), lambda c: (0, c, 0)),
            scratch_shapes=[pltpu.VMEM((Bp, Hp), jnp.float32)],
        ),
        compiler_params=pltpu.CompilerParams(
            # Sequential hidden-state carry through the VMEM scratch.
            # TODO(synk): for large B, add a leading batch-chunk "parallel"
            #             grid axis so both v7x TensorCores carry their own h.
            dimension_semantics=("arbitrary",),
        ),
        cost_estimate=pl.CostEstimate(
            flops=2 * T_pad * Bp * (Vp * Hp + Hp * Hp + Hp * Vp),
            transcendentals=T_pad * Bp * Hp,
            bytes_accessed=(4 * Bp * T_pad * Vp + 4 * T_pad * Bp
                            + 2 * (Vp * Hp + Hp * Hp + Hp * Vp)
                            + 4 * (Hp + Vp + Bp * Hp)),
        ),
    )(idx3, wxe_p, wh_p, bxh_p, wlm_p, blm_p, h0)

    # Batch-major already — only a slice, no transpose of the logits.
    logits = logits_pad[:B, :T, :V]

    loss = None
    if targets is not None:
        # cross_entropy with ignore_index=-1 (plain-JAX glue, f32).
        lg = logits.reshape(-1, V).astype(jnp.float32)
        tg = targets.reshape(-1)
        valid = tg != -1
        tg_safe = jnp.where(valid, tg, 0)
        logp = jax.nn.log_softmax(lg, axis=-1)
        nll = -jnp.take_along_axis(logp, tg_safe[:, None], axis=-1)[:, 0]
        loss = jnp.sum(jnp.where(valid, nll, 0.0)) / jnp.maximum(
            jnp.sum(valid.astype(jnp.float32)), 1.0)
    return logits, loss


# ------------------------------- Param init --------------------------------- #
def init_params(key, *, vocab_size, n_embd, n_embd2):
    ks = jax.random.split(key, 5)
    wte = jax.random.normal(ks[0], (vocab_size, n_embd), jnp.float32)
    start = jnp.zeros((1, n_embd2), jnp.float32)            # nn.Parameter zeros
    fan_in = n_embd + n_embd2
    lim = 1.0 / math.sqrt(fan_in)
    w_xh = jax.random.uniform(ks[1], (fan_in, n_embd2), jnp.float32, -lim, lim)
    b_xh = jax.random.uniform(ks[2], (1, n_embd2), jnp.float32, -lim, lim)
    w_x, w_h = w_xh[:n_embd], w_xh[n_embd:]
    lim2 = 1.0 / math.sqrt(n_embd2)
    w_lm = jax.random.uniform(ks[3], (n_embd2, vocab_size), jnp.float32, -lim2, lim2)
    b_lm = jax.random.uniform(ks[4], (1, vocab_size), jnp.float32, -lim2, lim2)
    return (wte, start, w_x, w_h, b_xh, w_lm, b_lm)


# ---------------------------------- Main ------------------------------------ #
if __name__ == "__main__":
    vocab_size, n_embd, n_embd2 = 16, 8, 32
    B, T = 2, 8

    key = jax.random.PRNGKey(0)
    k_idx, k_tgt, k_params = jax.random.split(key, 3)
    idx = jax.random.randint(k_idx, (B, T), 0, vocab_size, dtype=jnp.int32)
    targets = jax.random.randint(k_tgt, (B, T), 0, vocab_size, dtype=jnp.int32)
    targets = targets.at[0, 0].set(-1)   # exercise ignore_index=-1
    params = init_params(k_params, vocab_size=vocab_size,
                         n_embd=n_embd, n_embd2=n_embd2)

    logits, loss = rnn_forward(idx, params, vocab_size=vocab_size, targets=targets)
    logits = jax.block_until_ready(logits)
    loss = jax.block_until_ready(loss)

    # Pure-JAX high-precision reference of the module forward.
    wte, start, w_x, w_h, b_xh, w_lm, b_lm = params
    with jax.default_matmul_precision("float32"):
        emb_r = jnp.take(wte, idx, axis=0)                   # (B, T, E)
        h = jnp.broadcast_to(start, (B, n_embd2))
        hs = []
        for i in range(T):
            h = jnp.tanh(emb_r[:, i, :] @ w_x + h @ w_h + b_xh)
            hs.append(h)
        hidden_r = jnp.stack(hs, axis=1)                     # (B, T, H)
        ref_logits = hidden_r @ w_lm + b_lm                  # (B, T, V)

    lg_r = ref_logits.reshape(-1, vocab_size)
    tg_r = targets.reshape(-1)
    valid_r = tg_r != -1
    logp_r = jax.nn.log_softmax(lg_r, axis=-1)
    nll_r = -jnp.take_along_axis(logp_r, jnp.where(valid_r, tg_r, 0)[:, None],
                                 axis=-1)[:, 0]
    ref_loss = jnp.sum(jnp.where(valid_r, nll_r, 0.0)) / jnp.sum(
        valid_r.astype(jnp.float32))

    assert logits.shape == (B, T, vocab_size)
    # bf16 MXU operands with f32 accumulation / activations -> loose-but-
    # meaningful tolerance vs. the full-precision reference.
    max_err = float(jnp.max(jnp.abs(logits - ref_logits)))
    assert jnp.allclose(logits, ref_logits, atol=2e-2, rtol=2e-2), max_err
    assert bool(jnp.isfinite(loss))
    assert jnp.allclose(loss, ref_loss, atol=2e-2, rtol=2e-2)
    print("KERNEL_OK")
</pallas_src>

<mosaic_0001>
module attributes {stable_mosaic.version = 11 : i64} {
  func.func @_fused_rnn_kernel(%arg0: i32, %arg1: memref<8x8x1xi32, #tpu.memory_space<vmem>>, %arg2: memref<128x128xbf16, #tpu.memory_space<vmem>>, %arg3: memref<128x128xbf16, #tpu.memory_space<vmem>>, %arg4: memref<1x128xf32, #tpu.memory_space<vmem>>, %arg5: memref<128x128xbf16, #tpu.memory_space<vmem>>, %arg6: memref<1x128xf32, #tpu.memory_space<vmem>>, %arg7: memref<8x128xf32, #tpu.memory_space<vmem>>, %arg8: memref<8x8x128xf32, #tpu.memory_space<vmem>>, %arg9: memref<8x128xf32, #tpu.memory_space<vmem>>) attributes {dimension_semantics = [#tpu.dimension_semantics<arbitrary>], iteration_bounds = array<i64: 1>, scalar_prefetch = 0 : i64, scratch_operands = 1 : i64, tpu.core_type = #tpu.core_type<tc>, window_params = [{transform_indices = @transform_0, window_bounds = array<i64: 8, 8, 1>}, {pipeline_mode = #tpu.pipeline_mode<synchronous>, transform_indices = @transform_1, window_bounds = array<i64: 128, 128>}, {pipeline_mode = #tpu.pipeline_mode<synchronous>, transform_indices = @transform_2, window_bounds = array<i64: 128, 128>}, {pipeline_mode = #tpu.pipeline_mode<synchronous>, transform_indices = @transform_3, window_bounds = array<i64: 1, 128>}, {pipeline_mode = #tpu.pipeline_mode<synchronous>, transform_indices = @transform_4, window_bounds = array<i64: 128, 128>}, {pipeline_mode = #tpu.pipeline_mode<synchronous>, transform_indices = @transform_5, window_bounds = array<i64: 1, 128>}, {pipeline_mode = #tpu.pipeline_mode<synchronous>, transform_indices = @transform_6, window_bounds = array<i64: 8, 128>}, {transform_indices = @transform_7, window_bounds = array<i64: 8, 8, 128>}]} {
    %c0_i32 = arith.constant 0 : i32
    %0 = arith.cmpi eq, %arg0, %c0_i32 : i32
    %1 = arith.extui %0 : i1 to i32
    %c0_i32_0 = arith.constant 0 : i32
    %2 = arith.cmpi ne, %1, %c0_i32_0 : i32
    scf.if %2 {
      %c0_86 = arith.constant 0 : index
      %c0_87 = arith.constant 0 : index
      %203 = vector.load %arg7[%c0_86, %c0_87] : memref<8x128xf32, #tpu.memory_space<vmem>>, vector<8x128xf32>
      %c0_88 = arith.constant 0 : index
      %c0_89 = arith.constant 0 : index
      %204 = vector.load %arg9[%c0_88, %c0_89] : memref<8x128xf32, #tpu.memory_space<vmem>>, vector<8x128xf32>
      tpu.vector_store %arg9[%c0_88, %c0_89], %203 {strides = array<i32>} : memref<8x128xf32, #tpu.memory_space<vmem>>, vector<8x128xf32>,
    } else {
    }
    %c0 = arith.constant 0 : index
    %c0_1 = arith.constant 0 : index
    %3 = vector.load %arg2[%c0, %c0_1] : memref<128x128xbf16, #tpu.memory_space<vmem>>, vector<128x128xbf16>
    %c0_2 = arith.constant 0 : index
    %c0_3 = arith.constant 0 : index
    %4 = vector.load %arg3[%c0_2, %c0_3] : memref<128x128xbf16, #tpu.memory_space<vmem>>, vector<128x128xbf16>
    %c0_4 = arith.constant 0 : index
    %c0_5 = arith.constant 0 : index
    %5 = vector.load %arg5[%c0_4, %c0_5] : memref<128x128xbf16, #tpu.memory_space<vmem>>, vector<128x128xbf16>
    %c0_6 = arith.constant 0 : index
    %c0_7 = arith.constant 0 : index
    %6 = vector.load %arg4[%c0_6, %c0_7] : memref<1x128xf32, #tpu.memory_space<vmem>>, vector<1x128xf32>
    %c0_8 = arith.constant 0 : index
    %c0_9 = arith.constant 0 : index
    %7 = vector.load %arg6[%c0_8, %c0_9] : memref<1x128xf32, #tpu.memory_space<vmem>>, vector<1x128xf32>
    %8 = tpu.iota {dimensions = array<i32: 1>} : vector<8x128xi32>
    %c0_10 = arith.constant 0 : index
    %c0_11 = arith.constant 0 : index
    %9 = vector.load %arg9[%c0_10, %c0_11] : memref<8x128xf32, #tpu.memory_space<vmem>>, vector<8x128xf32>
    %c0_i32_12 = arith.constant 0 : i32
    %10 = arith.index_cast %c0_i32_12 : i32 to index
    %c0_13 = arith.constant 0 : index
    %c0_14 = arith.constant 0 : index
    %11 = vector.load %arg1[%10, %c0_13, %c0_14] : memref<8x8x1xi32, #tpu.memory_space<vmem>>, vector<1x8x1xi32>
    %12 = vector.shape_cast %11 : vector<1x8x1xi32> to vector<8x1xi32>
    %13 = vector.broadcast %12 : vector<8x1xi32> to vector<8x128xi32>
    %14 = arith.cmpi eq, %13, %8 : vector<8x128xi32>
    %cst = arith.constant 1.000000e+00 : f32
    %cst_15 = arith.constant 0.000000e+00 : f32
    %15 = vector.broadcast %cst : f32 to vector<8x128xf32>
    %16 = vector.broadcast %cst_15 : f32 to vector<8x128xf32>
    %17 = arith.select %14, %15, %16 : vector<8x128xi1>, vector<8x128xf32>
    %18 = arith.truncf %17 : vector<8x128xf32> to vector<8x128xbf16>
    %cst_16 = arith.constant dense<0.000000e+00> : vector<8x128xf32>
    %19 = tpu.matmul %18, %3, %cst_16 {dimension_numbers = #tpu.dot_dimension_numbers<[1], [0], [0], [1], [0, 0, 1, 1], [], []>} : vector<8x128xbf16>, vector<128x128xbf16>, vector<8x128xf32> -> vector<8x128xf32>
    %20 = arith.truncf %9 : vector<8x128xf32> to vector<8x128xbf16>
    %cst_17 = arith.constant dense<0.000000e+00> : vector<8x128xf32>
    %21 = tpu.matmul %20, %4, %cst_17 {dimension_numbers = #tpu.dot_dimension_numbers<[1], [0], [0], [1], [0, 0, 1, 1], [], []>} : vector<8x128xbf16>, vector<128x128xbf16>, vector<8x128xf32> -> vector<8x128xf32>
    %22 = arith.addf %19, %21 : vector<8x128xf32>
    %23 = vector.broadcast %6 : vector<1x128xf32> to vector<8x128xf32>
    %24 = arith.addf %22, %23 : vector<8x128xf32>
    %25 = math.tanh %24 : vector<8x128xf32>
    %26 = arith.truncf %25 : vector<8x128xf32> to vector<8x128xbf16>
    %cst_18 = arith.constant dense<0.000000e+00> : vector<8x128xf32>
    %27 = tpu.matmul %26, %5, %cst_18 {dimension_numbers = #tpu.dot_dimension_numbers<[1], [0], [0], [1], [0, 0, 1, 1], [], []>} : vector<8x128xbf16>, vector<128x128xbf16>, vector<8x128xf32> -> vector<8x128xf32>
    %28 = vector.broadcast %7 : vector<1x128xf32> to vector<8x128xf32>
    %29 = arith.addf %27, %28 : vector<8x128xf32>
    %c0_19 = arith.constant 0 : index
    %30 = arith.index_cast %c0_i32_12 : i32 to index
    %c0_20 = arith.constant 0 : index
    %31 = vector.load %arg8[%c0_19, %30, %c0_20] : memref<8x8x128xf32, #tpu.memory_space<vmem>>, vector<8x1x128xf32>
    %32 = vector.shape_cast %31 : vector<8x1x128xf32> to vector<8x128xf32>
    %33 = vector.shape_cast %29 : vector<8x128xf32> to vector<8x1x128xf32>
    tpu.vector_store %arg8[%c0_19, %30, %c0_20], %33 {strides = array<i32>} : memref<8x8x128xf32, #tpu.memory_space<vmem>>, vector<8x1x128xf32>,
    %c1_i32 = arith.constant 1 : i32
    %34 = arith.index_cast %c1_i32 : i32 to index
    %c0_21 = arith.constant 0 : index
    %c0_22 = arith.constant 0 : index
    %35 = vector.load %arg1[%34, %c0_21, %c0_22] : memref<8x8x1xi32, #tpu.memory_space<vmem>>, vector<1x8x1xi32>
    %36 = vector.shape_cast %35 : vector<1x8x1xi32> to vector<8x1xi32>
    %37 = vector.broadcast %36 : vector<8x1xi32> to vector<8x128xi32>
    %38 = arith.cmpi eq, %37, %8 : vector<8x128xi32>
    %cst_23 = arith.constant 1.000000e+00 : f32
    %cst_24 = arith.constant 0.000000e+00 : f32
    %39 = vector.broadcast %cst_23 : f32 to vector<8x128xf32>
    %40 = vector.broadcast %cst_24 : f32 to vector<8x128xf32>
    %41 = arith.select %38, %39, %40 : vector<8x128xi1>, vector<8x128xf32>
    %42 = arith.truncf %41 : vector<8x128xf32> to vector<8x128xbf16>
    %cst_25 = arith.constant dense<0.000000e+00> : vector<8x128xf32>
    %43 = tpu.matmul %42, %3, %cst_25 {dimension_numbers = #tpu.dot_dimension_numbers<[1], [0], [0], [1], [0, 0, 1, 1], [], []>} : vector<8x128xbf16>, vector<128x128xbf16>, vector<8x128xf32> -> vector<8x128xf32>
    %44 = arith.truncf %25 : vector<8x128xf32> to vector<8x128xbf16>
    %cst_26 = arith.constant dense<0.000000e+00> : vector<8x128xf32>
    %45 = tpu.matmul %44, %4, %cst_26 {dimension_numbers = #tpu.dot_dimension_numbers<[1], [0], [0], [1], [0, 0, 1, 1], [], []>} : vector<8x128xbf16>, vector<128x128xbf16>, vector<8x128xf32> -> vector<8x128xf32>
    %46 = arith.addf %43, %45 : vector<8x128xf32>
    %47 = vector.broadcast %6 : vector<1x128xf32> to vector<8x128xf32>
    %48 = arith.addf %46, %47 : vector<8x128xf32>
    %49 = math.tanh %48 : vector<8x128xf32>
    %50 = arith.truncf %49 : vector<8x128xf32> to vector<8x128xbf16>
    %cst_27 = arith.constant dense<0.000000e+00> : vector<8x128xf32>
    %51 = tpu.matmul %50, %5, %cst_27 {dimension_numbers = #tpu.dot_dimension_numbers<[1], [0], [0], [1], [0, 0, 1, 1], [], []>} : vector<8x128xbf16>, vector<128x128xbf16>, vector<8x128xf32> -> vector<8x128xf32>
    %52 = vector.broadcast %7 : vector<1x128xf32> to vector<8x128xf32>
    %53 = arith.addf %51, %52 : vector<8x128xf32>
    %c0_28 = arith.constant 0 : index
    %54 = arith.index_cast %c1_i32 : i32 to index
    %c0_29 = arith.constant 0 : index
    %55 = vector.load %arg8[%c0_28, %54, %c0_29] : memref<8x8x128xf32, #tpu.memory_space<vmem>>, vector<8x1x128xf32>
    %56 = vector.shape_cast %55 : vector<8x1x128xf32> to vector<8x128xf32>
    %57 = vector.shape_cast %53 : vector<8x128xf32> to vector<8x1x128xf32>
    tpu.vector_store %arg8[%c0_28, %54, %c0_29], %57 {strides = array<i32>} : memref<8x8x128xf32, #tpu.memory_space<vmem>>, vector<8x1x128xf32>,
    %c2_i32 = arith.constant 2 : i32
    %58 = arith.index_cast %c2_i32 : i32 to index
    %c0_30 = arith.constant 0 : index
    %c0_31 = arith.constant 0 : index
    %59 = vector.load %arg1[%58, %c0_30, %c0_31] : memref<8x8x1xi32, #tpu.memory_space<vmem>>, vector<1x8x1xi32>
    %60 = vector.shape_cast %59 : vector<1x8x1xi32> to vector<8x1xi32>
    %61 = vector.broadcast %60 : vector<8x1xi32> to vector<8x128xi32>
    %62 = arith.cmpi eq, %61, %8 : vector<8x128xi32>
    %cst_32 = arith.constant 1.000000e+00 : f32
    %cst_33 = arith.constant 0.000000e+00 : f32
    %63 = vector.broadcast %cst_32 : f32 to vector<8x128xf32>
    %64 = vector.broadcast %cst_33 : f32 to vector<8x128xf32>
    %65 = arith.select %62, %63, %64 : vector<8x128xi1>, vector<8x128xf32>
    %66 = arith.truncf %65 : vector<8x128xf32> to vector<8x128xbf16>
    %cst_34 = arith.constant dense<0.000000e+00> : vector<8x128xf32>
    %67 = tpu.matmul %66, %3, %cst_34 {dimension_numbers = #tpu.dot_dimension_numbers<[1], [0], [0], [1], [0, 0, 1, 1], [], []>} : vector<8x128xbf16>, vector<128x128xbf16>, vector<8x128xf32> -> vector<8x128xf32>
    %68 = arith.truncf %49 : vector<8x128xf32> to vector<8x128xbf16>
    %cst_35 = arith.constant dense<0.000000e+00> : vector<8x128xf32>
    %69 = tpu.matmul %68, %4, %cst_35 {dimension_numbers = #tpu.dot_dimension_numbers<[1], [0], [0], [1], [0, 0, 1, 1], [], []>} : vector<8x128xbf16>, vector<128x128xbf16>, vector<8x128xf32> -> vector<8x128xf32>
    %70 = arith.addf %67, %69 : vector<8x128xf32>
    %71 = vector.broadcast %6 : vector<1x128xf32> to vector<8x128xf32>
    %72 = arith.addf %70, %71 : vector<8x128xf32>
    %73 = math.tanh %72 : vector<8x128xf32>
    %74 = arith.truncf %73 : vector<8x128xf32> to vector<8x128xbf16>
    %cst_36 = arith.constant dense<0.000000e+00> : vector<8x128xf32>
    %75 = tpu.matmul %74, %5, %cst_36 {dimension_numbers = #tpu.dot_dimension_numbers<[1], [0], [0], [1], [0, 0, 1, 1], [], []>} : vector<8x128xbf16>, vector<128x128xbf16>, vector<8x128xf32> -> vector<8x128xf32>
    %76 = vector.broadcast %7 : vector<1x128xf32> to vector<8x128xf32>
    %77 = arith.addf %75, %76 : vector<8x128xf32>
    %c0_37 = arith.constant 0 : index
    %78 = arith.index_cast %c2_i32 : i32 to index
    %c0_38 = arith.constant 0 : index
    %79 = vector.load %arg8[%c0_37, %78, %c0_38] : memref<8x8x128xf32, #tpu.memory_space<vmem>>, vector<8x1x128xf32>
    %80 = vector.shape_cast %79 : vector<8x1x128xf32> to vector<8x128xf32>
    %81 = vector.shape_cast %77 : vector<8x128xf32> to vector<8x1x128xf32>
    tpu.vector_store %arg8[%c0_37, %78, %c0_38], %81 {strides = array<i32>} : memref<8x8x128xf32, #tpu.memory_space<vmem>>, vector<8x1x128xf32>,
    %c3_i32 = arith.constant 3 : i32
    %82 = arith.index_cast %c3_i32 : i32 to index
    %c0_39 = arith.constant 0 : index
    %c0_40 = arith.constant 0 : index
    %83 = vector.load %arg1[%82, %c0_39, %c0_40] : memref<8x8x1xi32, #tpu.memory_space<vmem>>, vector<1x8x1xi32>
    %84 = vector.shape_cast %83 : vector<1x8x1xi32> to vector<8x1xi32>
    %85 = vector.broadcast %84 : vector<8x1xi32> to vector<8x128xi32>
    %86 = arith.cmpi eq, %85, %8 : vector<8x128xi32>
    %cst_41 = arith.constant 1.000000e+00 : f32
    %cst_42 = arith.constant 0.000000e+00 : f32
    %87 = vector.broadcast %cst_41 : f32 to vector<8x128xf32>
    %88 = vector.broadcast %cst_42 : f32 to vector<8x128xf32>
    %89 = arith.select %86, %87, %88 : vector<8x128xi1>, vector<8x128xf32>
    %90 = arith.truncf %89 : vector<8x128xf32> to vector<8x128xbf16>
    %cst_43 = arith.constant dense<0.000000e+00> : vector<8x128xf32>
    %91 = tpu.matmul %90, %3, %cst_43 {dimension_numbers = #tpu.dot_dimension_numbers<[1], [0], [0], [1], [0, 0, 1, 1], [], []>} : vector<8x128xbf16>, vector<128x128xbf16>, vector<8x128xf32> -> vector<8x128xf32>
    %92 = arith.truncf %73 : vector<8x128xf32> to vector<8x128xbf16>
    %cst_44 = arith.constant dense<0.000000e+00> : vector<8x128xf32>
    %93 = tpu.matmul %92, %4, %cst_44 {dimension_numbers = #tpu.dot_dimension_numbers<[1], [0], [0], [1], [0, 0, 1, 1], [], []>} : vector<8x128xbf16>, vector<128x128xbf16>, vector<8x128xf32> -> vector<8x128xf32>
    %94 = arith.addf %91, %93 : vector<8x128xf32>
    %95 = vector.broadcast %6 : vector<1x128xf32> to vector<8x128xf32>
    %96 = arith.addf %94, %95 : vector<8x128xf32>
    %97 = math.tanh %96 : vector<8x128xf32>
    %98 = arith.truncf %97 : vector<8x128xf32> to vector<8x128xbf16>
    %cst_45 = arith.constant dense<0.000000e+00> : vector<8x128xf32>
    %99 = tpu.matmul %98, %5, %cst_45 {dimension_numbers = #tpu.dot_dimension_numbers<[1], [0], [0], [1], [0, 0, 1, 1], [], []>} : vector<8x128xbf16>, vector<128x128xbf16>, vector<8x128xf32> -> vector<8x128xf32>
    %100 = vector.broadcast %7 : vector<1x128xf32> to vector<8x128xf32>
    %101 = arith.addf %99, %100 : vector<8x128xf32>
    %c0_46 = arith.constant 0 : index
    %102 = arith.index_cast %c3_i32 : i32 to index
    %c0_47 = arith.constant 0 : index
    %103 = vector.load %arg8[%c0_46, %102, %c0_47] : memref<8x8x128xf32, #tpu.memory_space<vmem>>, vector<8x1x128xf32>
    %104 = vector.shape_cast %103 : vector<8x1x128xf32> to vector<8x128xf32>
    %105 = vector.shape_cast %101 : vector<8x128xf32> to vector<8x1x128xf32>
    tpu.vector_store %arg8[%c0_46, %102, %c0_47], %105 {strides = array<i32>} : memref<8x8x128xf32, #tpu.memory_space<vmem>>, vector<8x1x128xf32>,
    %c4_i32 = arith.constant 4 : i32
    %106 = arith.index_cast %c4_i32 : i32 to index
    %c0_48 = arith.constant 0 : index
    %c0_49 = arith.constant 0 : index
    %107 = vector.load %arg1[%106, %c0_48, %c0_49] : memref<8x8x1xi32, #tpu.memory_space<vmem>>, vector<1x8x1xi32>
    %108 = vector.shape_cast %107 : vector<1x8x1xi32> to vector<8x1xi32>
    %109 = vector.broadcast %108 : vector<8x1xi32> to vector<8x128xi32>
    %110 = arith.cmpi eq, %109, %8 : vector<8x128xi32>
    %cst_50 = arith.constant 1.000000e+00 : f32
    %cst_51 = arith.constant 0.000000e+00 : f32
    %111 = vector.broadcast %cst_50 : f32 to vector<8x128xf32>
    %112 = vector.broadcast %cst_51 : f32 to vector<8x128xf32>
    %113 = arith.select %110, %111, %112 : vector<8x128xi1>, vector<8x128xf32>
    %114 = arith.truncf %113 : vector<8x128xf32> to vector<8x128xbf16>
    %cst_52 = arith.constant dense<0.000000e+00> : vector<8x128xf32>
    %115 = tpu.matmul %114, %3, %cst_52 {dimension_numbers = #tpu.dot_dimension_numbers<[1], [0], [0], [1], [0, 0, 1, 1], [], []>} : vector<8x128xbf16>, vector<128x128xbf16>, vector<8x128xf32> -> vector<8x128xf32>
    %116 = arith.truncf %97 : vector<8x128xf32> to vector<8x128xbf16>
    %cst_53 = arith.constant dense<0.000000e+00> : vector<8x128xf32>
    %117 = tpu.matmul %116, %4, %cst_53 {dimension_numbers = #tpu.dot_dimension_numbers<[1], [0], [0], [1], [0, 0, 1, 1], [], []>} : vector<8x128xbf16>, vector<128x128xbf16>, vector<8x128xf32> -> vector<8x128xf32>
    %118 = arith.addf %115, %117 : vector<8x128xf32>
    %119 = vector.broadcast %6 : vector<1x128xf32> to vector<8x128xf32>
    %120 = arith.addf %118, %119 : vector<8x128xf32>
    %121 = math.tanh %120 : vector<8x128xf32>
    %122 = arith.truncf %121 : vector<8x128xf32> to vector<8x128xbf16>
    %cst_54 = arith.constant dense<0.000000e+00> : vector<8x128xf32>
    %123 = tpu.matmul %122, %5, %cst_54 {dimension_numbers = #tpu.dot_dimension_numbers<[1], [0], [0], [1], [0, 0, 1, 1], [], []>} : vector<8x128xbf16>, vector<128x128xbf16>, vector<8x128xf32> -> vector<8x128xf32>
    %124 = vector.broadcast %7 : vector<1x128xf32> to vector<8x128xf32>
    %125 = arith.addf %123, %124 : vector<8x128xf32>
    %c0_55 = arith.constant 0 : index
    %126 = arith.index_cast %c4_i32 : i32 to index
    %c0_56 = arith.constant 0 : index
    %127 = vector.load %arg8[%c0_55, %126, %c0_56] : memref<8x8x128xf32, #tpu.memory_space<vmem>>, vector<8x1x128xf32>
    %128 = vector.shape_cast %127 : vector<8x1x128xf32> to vector<8x128xf32>
    %129 = vector.shape_cast %125 : vector<8x128xf32> to vector<8x1x128xf32>
    tpu.vector_store %arg8[%c0_55, %126, %c0_56], %129 {strides = array<i32>} : memref<8x8x128xf32, #tpu.memory_space<vmem>>, vector<8x1x128xf32>,
    %c5_i32 = arith.constant 5 : i32
    %130 = arith.index_cast %c5_i32 : i32 to index
    %c0_57 = arith.constant 0 : index
    %c0_58 = arith.constant 0 : index
    %131 = vector.load %arg1[%130, %c0_57, %c0_58] : memref<8x8x1xi32, #tpu.memory_space<vmem>>, vector<1x8x1xi32>
    %132 = vector.shape_cast %131 : vector<1x8x1xi32> to vector<8x1xi32>
    %133 = vector.broadcast %132 : vector<8x1xi32> to vector<8x128xi32>
    %134 = arith.cmpi eq, %133, %8 : vector<8x128xi32>
    %cst_59 = arith.constant 1.000000e+00 : f32
    %cst_60 = arith.constant 0.000000e+00 : f32
    %135 = vector.broadcast %cst_59 : f32 to vector<8x128xf32>
    %136 = vector.broadcast %cst_60 : f32 to vector<8x128xf32>
    %137 = arith.select %134, %135, %136 : vector<8x128xi1>, vector<8x128xf32>
    %138 = arith.truncf %137 : vector<8x128xf32> to vector<8x128xbf16>
    %cst_61 = arith.constant dense<0.000000e+00> : vector<8x128xf32>
    %139 = tpu.matmul %138, %3, %cst_61 {dimension_numbers = #tpu.dot_dimension_numbers<[1], [0], [0], [1], [0, 0, 1, 1], [], []>} : vector<8x128xbf16>, vector<128x128xbf16>, vector<8x128xf32> -> vector<8x128xf32>
    %140 = arith.truncf %121 : vector<8x128xf32> to vector<8x128xbf16>
    %cst_62 = arith.constant dense<0.000000e+00> : vector<8x128xf32>
    %141 = tpu.matmul %140, %4, %cst_62 {dimension_numbers = #tpu.dot_dimension_numbers<[1], [0], [0], [1], [0, 0, 1, 1], [], []>} : vector<8x128xbf16>, vector<128x128xbf16>, vector<8x128xf32> -> vector<8x128xf32>
    %142 = arith.addf %139, %141 : vector<8x128xf32>
    %143 = vector.broadcast %6 : vector<1x128xf32> to vector<8x128xf32>
    %144 = arith.addf %142, %143 : vector<8x128xf32>
    %145 = math.tanh %144 : vector<8x128xf32>
    %146 = arith.truncf %145 : vector<8x128xf32> to vector<8x128xbf16>
    %cst_63 = arith.constant dense<0.000000e+00> : vector<8x128xf32>
    %147 = tpu.matmul %146, %5, %cst_63 {dimension_numbers = #tpu.dot_dimension_numbers<[1], [0], [0], [1], [0, 0, 1, 1], [], []>} : vector<8x128xbf16>, vector<128x128xbf16>, vector<8x128xf32> -> vector<8x128xf32>
    %148 = vector.broadcast %7 : vector<1x128xf32> to vector<8x128xf32>
    %149 = arith.addf %147, %148 : vector<8x128xf32>
    %c0_64 = arith.constant 0 : index
    %150 = arith.index_cast %c5_i32 : i32 to index
    %c0_65 = arith.constant 0 : index
    %151 = vector.load %arg8[%c0_64, %150, %c0_65] : memref<8x8x128xf32, #tpu.memory_space<vmem>>, vector<8x1x128xf32>
    %152 = vector.shape_cast %151 : vector<8x1x128xf32> to vector<8x128xf32>
    %153 = vector.shape_cast %149 : vector<8x128xf32> to vector<8x1x128xf32>
    tpu.vector_store %arg8[%c0_64, %150, %c0_65], %153 {strides = array<i32>} : memref<8x8x128xf32, #tpu.memory_space<vmem>>, vector<8x1x128xf32>,
    %c6_i32 = arith.constant 6 : i32
    %154 = arith.index_cast %c6_i32 : i32 to index
    %c0_66 = arith.constant 0 : index
    %c0_67 = arith.constant 0 : index
    %155 = vector.load %arg1[%154, %c0_66, %c0_67] : memref<8x8x1xi32, #tpu.memory_space<vmem>>, vector<1x8x1xi32>
    %156 = vector.shape_cast %155 : vector<1x8x1xi32> to vector<8x1xi32>
    %157 = vector.broadcast %156 : vector<8x1xi32> to vector<8x128xi32>
    %158 = arith.cmpi eq, %157, %8 : vector<8x128xi32>
    %cst_68 = arith.constant 1.000000e+00 : f32
    %cst_69 = arith.constant 0.000000e+00 : f32
    %159 = vector.broadcast %cst_68 : f32 to vector<8x128xf32>
    %160 = vector.broadcast %cst_69 : f32 to vector<8x128xf32>
    %161 = arith.select %158, %159, %160 : vector<8x128xi1>, vector<8x128xf32>
    %162 = arith.truncf %161 : vector<8x128xf32> to vector<8x128xbf16>
    %cst_70 = arith.constant dense<0.000000e+00> : vector<8x128xf32>
    %163 = tpu.matmul %162, %3, %cst_70 {dimension_numbers = #tpu.dot_dimension_numbers<[1], [0], [0], [1], [0, 0, 1, 1], [], []>} : vector<8x128xbf16>, vector<128x128xbf16>, vector<8x128xf32> -> vector<8x128xf32>
    %164 = arith.truncf %145 : vector<8x128xf32> to vector<8x128xbf16>
    %cst_71 = arith.constant dense<0.000000e+00> : vector<8x128xf32>
    %165 = tpu.matmul %164, %4, %cst_71 {dimension_numbers = #tpu.dot_dimension_numbers<[1], [0], [0], [1], [0, 0, 1, 1], [], []>} : vector<8x128xbf16>, vector<128x128xbf16>, vector<8x128xf32> -> vector<8x128xf32>
    %166 = arith.addf %163, %165 : vector<8x128xf32>
    %167 = vector.broadcast %6 : vector<1x128xf32> to vector<8x128xf32>
    %168 = arith.addf %166, %167 : vector<8x128xf32>
    %169 = math.tanh %168 : vector<8x128xf32>
    %170 = arith.truncf %169 : vector<8x128xf32> to vector<8x128xbf16>
    %cst_72 = arith.constant dense<0.000000e+00> : vector<8x128xf32>
    %171 = tpu.matmul %170, %5, %cst_72 {dimension_numbers = #tpu.dot_dimension_numbers<[1], [0], [0], [1], [0, 0, 1, 1], [], []>} : vector<8x128xbf16>, vector<128x128xbf16>, vector<8x128xf32> -> vector<8x128xf32>
    %172 = vector.broadcast %7 : vector<1x128xf32> to vector<8x128xf32>
    %173 = arith.addf %171, %172 : vector<8x128xf32>
    %c0_73 = arith.constant 0 : index
    %174 = arith.index_cast %c6_i32 : i32 to index
    %c0_74 = arith.constant 0 : index
    %175 = vector.load %arg8[%c0_73, %174, %c0_74] : memref<8x8x128xf32, #tpu.memory_space<vmem>>, vector<8x1x128xf32>
    %176 = vector.shape_cast %175 : vector<8x1x128xf32> to vector<8x128xf32>
    %177 = vector.shape_cast %173 : vector<8x128xf32> to vector<8x1x128xf32>
    tpu.vector_store %arg8[%c0_73, %174, %c0_74], %177 {strides = array<i32>} : memref<8x8x128xf32, #tpu.memory_space<vmem>>, vector<8x1x128xf32>,
    %c7_i32 = arith.constant 7 : i32
    %178 = arith.index_cast %c7_i32 : i32 to index
    %c0_75 = arith.constant 0 : index
    %c0_76 = arith.constant 0 : index
    %179 = vector.load %arg1[%178, %c0_75, %c0_76] : memref<8x8x1xi32, #tpu.memory_space<vmem>>, vector<1x8x1xi32>
    %180 = vector.shape_cast %179 : vector<1x8x1xi32> to vector<8x1xi32>
    %181 = vector.broadcast %180 : vector<8x1xi32> to vector<8x128xi32>
    %182 = arith.cmpi eq, %181, %8 : vector<8x128xi32>
    %cst_77 = arith.constant 1.000000e+00 : f32
    %cst_78 = arith.constant 0.000000e+00 : f32
    %183 = vector.broadcast %cst_77 : f32 to vector<8x128xf32>
    %184 = vector.broadcast %cst_78 : f32 to vector<8x128xf32>
    %185 = arith.select %182, %183, %184 : vector<8x128xi1>, vector<8x128xf32>
    %186 = arith.truncf %185 : vector<8x128xf32> to vector<8x128xbf16>
    %cst_79 = arith.constant dense<0.000000e+00> : vector<8x128xf32>
    %187 = tpu.matmul %186, %3, %cst_79 {dimension_numbers = #tpu.dot_dimension_numbers<[1], [0], [0], [1], [0, 0, 1, 1], [], []>} : vector<8x128xbf16>, vector<128x128xbf16>, vector<8x128xf32> -> vector<8x128xf32>
    %188 = arith.truncf %169 : vector<8x128xf32> to vector<8x128xbf16>
    %cst_80 = arith.constant dense<0.000000e+00> : vector<8x128xf32>
    %189 = tpu.matmul %188, %4, %cst_80 {dimension_numbers = #tpu.dot_dimension_numbers<[1], [0], [0], [1], [0, 0, 1, 1], [], []>} : vector<8x128xbf16>, vector<128x128xbf16>, vector<8x128xf32> -> vector<8x128xf32>
    %190 = arith.addf %187, %189 : vector<8x128xf32>
    %191 = vector.broadcast %6 : vector<1x128xf32> to vector<8x128xf32>
    %192 = arith.addf %190, %191 : vector<8x128xf32>
    %193 = math.tanh %192 : vector<8x128xf32>
    %194 = arith.truncf %193 : vector<8x128xf32> to vector<8x128xbf16>
    %cst_81 = arith.constant dense<0.000000e+00> : vector<8x128xf32>
    %195 = tpu.matmul %194, %5, %cst_81 {dimension_numbers = #tpu.dot_dimension_numbers<[1], [0], [0], [1], [0, 0, 1, 1], [], []>} : vector<8x128xbf16>, vector<128x128xbf16>, vector<8x128xf32> -> vector<8x128xf32>
    %196 = vector.broadcast %7 : vector<1x128xf32> to vector<8x128xf32>
    %197 = arith.addf %195, %196 : vector<8x128xf32>
    %c0_82 = arith.constant 0 : index
    %198 = arith.index_cast %c7_i32 : i32 to index
    %c0_83 = arith.constant 0 : index
    %199 = vector.load %arg8[%c0_82, %198, %c0_83] : memref<8x8x128xf32, #tpu.memory_space<vmem>>, vector<8x1x128xf32>
    %200 = vector.shape_cast %199 : vector<8x1x128xf32> to vector<8x128xf32>
    %201 = vector.shape_cast %197 : vector<8x128xf32> to vector<8x1x128xf32>
    tpu.vector_store %arg8[%c0_82, %198, %c0_83], %201 {strides = array<i32>} : memref<8x8x128xf32, #tpu.memory_space<vmem>>, vector<8x1x128xf32>,
    %c8_i32 = arith.constant 8 : i32
    %c0_84 = arith.constant 0 : index
    %c0_85 = arith.constant 0 : index
    %202 = vector.load %arg9[%c0_84, %c0_85] : memref<8x128xf32, #tpu.memory_space<vmem>>, vector<8x128xf32>
    tpu.vector_store %arg9[%c0_84, %c0_85], %193 {strides = array<i32>} : memref<8x128xf32, #tpu.memory_space<vmem>>, vector<8x128xf32>,
    return
  }
  func.func @transform_0(%arg0: i32) -> (i32, i32, i32) {
    %c0_i32 = arith.constant 0 : i32
    %c0_i32_0 = arith.constant 0 : i32
    %c0_i32_1 = arith.constant 0 : i32
    return %arg0, %c0_i32, %c0_i32_0 : i32, i32, i32
  }
  func.func @transform_1(%arg0: i32) -> (i32, i32) {
    %c0_i32 = arith.constant 0 : i32
    %c0_i32_0 = arith.constant 0 : i32
    %c0_i32_1 = arith.constant 0 : i32
    return %c0_i32, %c0_i32_0 : i32, i32
  }
  func.func @transform_2(%arg0: i32) -> (i32, i32) {
    %c0_i32 = arith.constant 0 : i32
    %c0_i32_0 = arith.constant 0 : i32
    %c0_i32_1 = arith.constant 0 : i32
    return %c0_i32, %c0_i32_0 : i32, i32
  }
  func.func @transform_3(%arg0: i32) -> (i32, i32) {
    %c0_i32 = arith.constant 0 : i32
    %c0_i32_0 = arith.constant 0 : i32
    %c0_i32_1 = arith.constant 0 : i32
    return %c0_i32, %c0_i32_0 : i32, i32
  }
  func.func @transform_4(%arg0: i32) -> (i32, i32) {
    %c0_i32 = arith.constant 0 : i32
    %c0_i32_0 = arith.constant 0 : i32
    %c0_i32_1 = arith.constant 0 : i32
    return %c0_i32, %c0_i32_0 : i32, i32
  }
  func.func @transform_5(%arg0: i32) -> (i32, i32) {
    %c0_i32 = arith.constant 0 : i32
    %c0_i32_0 = arith.constant 0 : i32
    %c0_i32_1 = arith.constant 0 : i32
    return %c0_i32, %c0_i32_0 : i32, i32
  }
  func.func @transform_6(%arg0: i32) -> (i32, i32) {
    %c0_i32 = arith.constant 0 : i32
    %c0_i32_0 = arith.constant 0 : i32
    %c0_i32_1 = arith.constant 0 : i32
    return %c0_i32, %c0_i32_0 : i32, i32
  }
  func.func @transform_7(%arg0: i32) -> (i32, i32, i32) {
    %c0_i32 = arith.constant 0 : i32
    %c0_i32_0 = arith.constant 0 : i32
    %c0_i32_1 = arith.constant 0 : i32
    return %c0_i32, %arg0, %c0_i32_0 : i32, i32, i32
  }
}

</mosaic_0001>

<llo_original>
// kernel: tpu_custom_call.1
$region0: #{tpu_custom_call.1}
  #allocation0 [shape = 'u32[]', space=smem, size = 0x4, offset = 0x4, fixed_abs, tag = 'smem constant byte address 0x4 - core index']
  #allocation1 [shape = 'u32[144,128]{1,0:T(1,128)}', space=vmem, size = 0x12000, scoped, tag = 'internal scratch']
  #allocation2 [shape = 'f32[8,128]{1,0:T(8,128)}', space=vmem, size = 0x1000, scoped, tag = 'scratch operand']
  %s0 = inlined_call_operand.vmem [shape: s32[8,8,1], index: 0, kind: input, shape index: {}]
  %s1 = inlined_call_operand.vmem [shape: bf16[128,128], index: 1, kind: input, shape index: {}]
  %s2 = inlined_call_operand.hbm [shape: bf16[128,128], index: 2, kind: input, shape index: {}]
  %s3 = inlined_call_operand.vmem [shape: f32[1,128], index: 3, kind: input, shape index: {}]
  %s4 = inlined_call_operand.hbm [shape: bf16[128,128], index: 4, kind: input, shape index: {}]
  %s5 = inlined_call_operand.vmem [shape: f32[1,128], index: 5, kind: input, shape index: {}]
  %s6 = inlined_call_operand.vmem [shape: f32[8,128], index: 6, kind: input, shape index: {}]
  %s7 = inlined_call_operand.hbm [shape: f32[8,8,128], index: 7, kind: output, shape index: {}]
  %s8 = sld [smem:[#allocation0]]
  $region50: #{tpu_custom_call.1} parent=0
    _
  %s10 = ssub.s32 1, %s8
  %s11 = scalar_select 0, %s10, %s8
  $region1: #{tpu_custom_call.1} parent=0
    #allocation3 [shape = 'u8[32768]{0}', space=vmem, size = 0x8000, scoped, tag = 'input window, operand 2, single buffered']
    #allocation4 [shape = 's32[1]{0}', space=sflag, size = 0x4, scoped, tag = 'scoped memory for tpu_custom_call.1']
    #allocation5 [shape = 's32[1]{0}', space=sflag, size = 0x4, scoped, tag = 'scoped memory for tpu_custom_call.1']
    #allocation6 [shape = 'u8[32768]{0}', space=vmem, size = 0x8000, scoped, tag = 'input window, operand 4, single buffered']
    #allocation7 [shape = 's32[1]{0}', space=sflag, size = 0x4, scoped, tag = 'scoped memory for tpu_custom_call.1']
    #allocation8 [shape = 'u8[32768]{0}', space=vmem, size = 0x8000, scoped, tag = 'output window, operand 0, single buffered']
    %12 = vsyncpa [#allocation4], 0
    %13 = vsyncpa [#allocation7], 0
    %14 = vsyncpa [#allocation5], 0
    // Predicated region
    $region2: #{tpu_custom_call.1} parent=1 // pred_check
      _
    $region3: #{tpu_custom_call.1} parent=1 // pred_check_branch
      %16 = sbr.rel (0) target = $region5
    $region4: #{tpu_custom_call.1} parent=1 // pred_region
      _
    $region5: #{tpu_custom_call.1} parent=1 // pred_fallthru
      _
    // Predicated region
    $region6: #{tpu_custom_call.1} parent=1 // pred_check
      _
    $region7: #{tpu_custom_call.1} parent=1 // pred_check_branch
      %18 = sbr.rel (0) target = $region9
    $region8: #{tpu_custom_call.1} parent=1 // pred_region
      _
    $region9: #{tpu_custom_call.1} parent=1 // pred_fallthru
      _
    // Predicated region
    $region10: #{tpu_custom_call.1} parent=1 // pred_check
      _
    $region11: #{tpu_custom_call.1} parent=1 // pred_check_branch
      %20 = sbr.rel (0) target = $region13
    $region12: #{tpu_custom_call.1} parent=1 // pred_region
      %s22 = ssub.s32 1024, 1024
      %23 = vsyncadd [#allocation4], %s22
      %s24 = sshll.u32 [#allocation3], 4
      %s25 = int_to_ptr.vmem [resolvable:$true] %s24
      %30 = dma.hbm_to_vmem [thread:$0]  %s2, 1024, %s25, [#allocation4], 64, 64, 4
    $region13: #{tpu_custom_call.1} parent=1 // pred_fallthru
      _
    // Predicated region
    $region14: #{tpu_custom_call.1} parent=1 // pred_check
      _
    $region15: #{tpu_custom_call.1} parent=1 // pred_check_branch
      %32 = sbr.rel (0) target = $region17
    $region16: #{tpu_custom_call.1} parent=1 // pred_region
      _
    $region17: #{tpu_custom_call.1} parent=1 // pred_fallthru
      _
    // Predicated region
    $region18: #{tpu_custom_call.1} parent=1 // pred_check
      _
    $region19: #{tpu_custom_call.1} parent=1 // pred_check_branch
      %34 = sbr.rel (0) target = $region21
    $region20: #{tpu_custom_call.1} parent=1 // pred_region
      %s36 = ssub.s32 1024, 1024
      %37 = vsyncadd [#allocation7], %s36
      %s38 = sshll.u32 [#allocation6], 4
      %s39 = int_to_ptr.vmem [resolvable:$true] %s38
      %44 = dma.hbm_to_vmem [thread:$0]  %s4, 1024, %s39, [#allocation7], 64, 64, 4
    $region21: #{tpu_custom_call.1} parent=1 // pred_fallthru
      _
    // Predicated region
    $region22: #{tpu_custom_call.1} parent=1 // pred_check
      _
    $region23: #{tpu_custom_call.1} parent=1 // pred_check_branch
      %46 = sbr.rel (0) target = $region25
    $region24: #{tpu_custom_call.1} parent=1 // pred_region
      _
    $region25: #{tpu_custom_call.1} parent=1 // pred_fallthru
      _
    // Predicated region
    $region26: #{tpu_custom_call.1} parent=1 // pred_check
      _
    $region27: #{tpu_custom_call.1} parent=1 // pred_check_branch
      %48 = sbr.rel (0) target = $region29
    $region28: #{tpu_custom_call.1} parent=1 // pred_region
      _
    $region29: #{tpu_custom_call.1} parent=1 // pred_fallthru
      _
    // Predicated region
    $region30: #{tpu_custom_call.1} parent=1 // pred_check
      _
    $region31: #{tpu_custom_call.1} parent=1 // pred_check_branch
      %50 = sbr.rel (0) target = $region33
    $region32: #{tpu_custom_call.1} parent=1 // pred_region
      %51 = dma.done [#allocation4], 1024
    $region33: #{tpu_custom_call.1} parent=1 // pred_fallthru
      _
    // Predicated region
    $region34: #{tpu_custom_call.1} parent=1 // pred_check
      _
    $region35: #{tpu_custom_call.1} parent=1 // pred_check_branch
      %53 = sbr.rel (0) target = $region37
    $region36: #{tpu_custom_call.1} parent=1 // pred_region
      %54 = dma.done [#allocation7], 1024
    $region37: #{tpu_custom_call.1} parent=1 // pred_fallthru
      _
    %p56 = scmp.eq.s32.totalorder 0, 0
    // Predicated region
    $region38: #{tpu_custom_call.1} parent=1 // pred_check
      %p57 = pneg %p56
    $region39: #{tpu_custom_call.1} parent=1 // pred_check_branch
      %59 = sbr.rel (%p57) target = $region41
    $region40: #{tpu_custom_call.1} parent=1 // pred_region
      %v60 = vld [vmem:[%s6] sm:$0xff]
      %61 = vst [vmem:[#allocation2] sm:$0xff] %v60
    $region41: #{tpu_custom_call.1} parent=1 // pred_fallthru
      _
    %v62 = vld [vmem:[%s1] sm:$0xf]
    %v63 = vld [vmem:[%s1 + $0x4] sm:$0xf]
    %v64 = vld [vmem:[%s1 + $0x8] sm:$0xf]
    %v65 = vld [vmem:[%s1 + $0xc] sm:$0xf]
    %v66 = vld [vmem:[%s1 + $0x10] sm:$0xf]
    %v67 = vld [vmem:[%s1 + $0x14] sm:$0xf]
    %v68 = vld [vmem:[%s1 + $0x18] sm:$0xf]
    %v69 = vld [vmem:[%s1 + $0x1c] sm:$0xf]
    %v70 = vld [vmem:[%s1 + $0x20] sm:$0xf]
    %v71 = vld [vmem:[%s1 + $0x24] sm:$0xf]
    %v72 = vld [vmem:[%s1 + $0x28] sm:$0xf]
    %v73 = vld [vmem:[%s1 + $0x2c] sm:$0xf]
    %v74 = vld [vmem:[%s1 + $0x30] sm:$0xf]
    %v75 = vld [vmem:[%s1 + $0x34] sm:$0xf]
    %v76 = vld [vmem:[%s1 + $0x38] sm:$0xf]
    %v77 = vld [vmem:[%s1 + $0x3c] sm:$0xf]
    %v78 = vld [vmem:[#allocation3] sm:$0xf]
    %v79 = vld [vmem:[#allocation3 + $0x4] sm:$0xf]
    %v80 = vld [vmem:[#allocation3 + $0x8] sm:$0xf]
    %v81 = vld [vmem:[#allocation3 + $0xc] sm:$0xf]
    %v82 = vld [vmem:[#allocation3 + $0x10] sm:$0xf]
    %v83 = vld [vmem:[#allocation3 + $0x14] sm:$0xf]
    %v84 = vld [vmem:[#allocation3 + $0x18] sm:$0xf]
    %v85 = vld [vmem:[#allocation3 + $0x1c] sm:$0xf]
    %v86 = vld [vmem:[#allocation3 + $0x20] sm:$0xf]
    %v87 = vld [vmem:[#allocation3 + $0x24] sm:$0xf]
    %v88 = vld [vmem:[#allocation3 + $0x28] sm:$0xf]
    %v89 = vld [vmem:[#allocation3 + $0x2c] sm:$0xf]
    %v90 = vld [vmem:[#allocation3 + $0x30] sm:$0xf]
    %v91 = vld [vmem:[#allocation3 + $0x34] sm:$0xf]
    %v92 = vld [vmem:[#allocation3 + $0x38] sm:$0xf]
    %v93 = vld [vmem:[#allocation3 + $0x3c] sm:$0xf]
    %v94 = vld [vmem:[#allocation6] sm:$0xf]
    %v95 = vld [vmem:[#allocation6 + $0x4] sm:$0xf]
    %v96 = vld [vmem:[#allocation6 + $0x8] sm:$0xf]
    %v97 = vld [vmem:[#allocation6 + $0xc] sm:$0xf]
    %v98 = vld [vmem:[#allocation6 + $0x10] sm:$0xf]
    %v99 = vld [vmem:[#allocation6 + $0x14] sm:$0xf]
    %v100 = vld [vmem:[#allocation6 + $0x18] sm:$0xf]
    %v101 = vld [vmem:[#allocation6 + $0x1c] sm:$0xf]
    %v102 = vld [vmem:[#allocation6 + $0x20] sm:$0xf]
    %v103 = vld [vmem:[#allocation6 + $0x24] sm:$0xf]
    %v104 = vld [vmem:[#allocation6 + $0x28] sm:$0xf]
    %v105 = vld [vmem:[#allocation6 + $0x2c] sm:$0xf]
    %v106 = vld [vmem:[#allocation6 + $0x30] sm:$0xf]
    %v107 = vld [vmem:[#allocation6 + $0x34] sm:$0xf]
    %v108 = vld [vmem:[#allocation6 + $0x38] sm:$0xf]
    %v109 = vld [vmem:[#allocation6 + $0x3c] sm:$0xf]
    %v110 = vld [vmem:[%s3] sm:$0x1]
    %v111 = vld [vmem:[%s5] sm:$0x1]
    %v112 = vlaneseq
    %v113 = vand.u32 %v112, 127
    %v114 = vld [vmem:[#allocation2] sm:$0xff]
    %v115 = vld [vmem:[%s0] sm:$0xff]
    %116 = vset.pattern.permute.xlu0 0
    %117 = vperm.xlu0 %116, %v115
    %v118 = vpop.permute.xlu0 %117
    %vm119 = vcmp.eq.s32.totalorder %v118, %v113
    %v120 = vsel %vm119, 1.0, 0.0
    %v121 = vpack.c.bf16 %v120, %v120
    %v122 = vpack.c.bf16 %v114, %v114
    %v139 = vunpack.c.l.b16 %v78
    %v140 = vunpack.c.l.b16 %v79
    %v141 = vunpack.c.l.b16 %v80
    %v142 = vunpack.c.l.b16 %v81
    %v143 = vunpack.c.l.b16 %v82
    %v144 = vunpack.c.l.b16 %v83
    %v145 = vunpack.c.l.b16 %v84
    %v146 = vunpack.c.l.b16 %v85
    %v147 = vunpack.c.l.b16 %v86
    %v148 = vunpack.c.l.b16 %v87
    %v149 = vunpack.c.l.b16 %v88
    %v150 = vunpack.c.l.b16 %v89
    %v151 = vunpack.c.l.b16 %v90
    %v152 = vunpack.c.l.b16 %v91
    %v153 = vunpack.c.l.b16 %v92
    %v154 = vunpack.c.l.b16 %v93
    %v155 = vpack.c.b16 %v140, %v139
    %v156 = vpack.c.b16 %v142, %v141
    %v157 = vpack.c.b16 %v144, %v143
    %v158 = vpack.c.b16 %v146, %v145
    %v159 = vpack.c.b16 %v148, %v147
    %v160 = vpack.c.b16 %v150, %v149
    %v161 = vpack.c.b16 %v152, %v151
    %v162 = vpack.c.b16 %v154, %v153
    %171 = vmatprep.subr.bf16.mxu0 0
    %172 = vmatpush1.bf16.msra.mxu0 %v155
    %173 = vmatprep.subr.bf16.mxu0 0
    %174 = vmatpush1.bf16.msra.mxu0 %v156
    %175 = vmatprep.subr.bf16.mxu0 0
    %176 = vmatpush1.bf16.msra.mxu0 %v157
    %177 = vmatprep.subr.bf16.mxu0 0
    %178 = vmatpush1.bf16.msra.mxu0 %v158
    %179 = vmatprep.subr.bf16.mxu0 0
    %180 = vmatpush1.bf16.msra.mxu0 %v159
    %181 = vmatprep.subr.bf16.mxu0 0
    %182 = vmatpush1.bf16.msra.mxu0 %v160
    %183 = vmatprep.subr.bf16.mxu0 0
    %184 = vmatpush1.bf16.msra.mxu0 %v161
    %185 = vmatprep.subr.bf16.mxu0 0
    %186 = vmatpush1.bf16.msra.mxu0 %v162
    %187 = vmatprep.subr.bf16.mxu0 0
    %188 = vmatpush1.bf16.msra.mxu0 0
    %189 = vmatprep.subr.bf16.mxu0 0
    %190 = vmatpush1.bf16.msra.mxu0 0
    %191 = vmatprep.subr.bf16.mxu0 0
    %192 = vmatpush1.bf16.msra.mxu0 0
    %193 = vmatprep.subr.bf16.mxu0 0
    %194 = vmatpush1.bf16.msra.mxu0 0
    %195 = vmatprep.subr.bf16.mxu0 0
    %196 = vmatpush1.bf16.msra.mxu0 0
    %197 = vmatprep.subr.bf16.mxu0 0
    %198 = vmatpush1.bf16.msra.mxu0 0
    %199 = vmatprep.subr.bf16.mxu0 0
    %200 = vmatpush1.bf16.msra.mxu0 0
    %201 = vmatprep.subr.bf16.mxu0 0
    %202 = vmatpush1.bf16.msra.mxu0 0
    %203 = vmatprep.mubr.bf16.mxu0 0
    %204 = vmatmul.mubr.bf16.gmra.mrb[0].mxu0 %v122
    %v205 = vpop.f32.mrb[0].mxu0
    %v206 = vadd.f32 0.0, %v205
    %v207 = vpop.f32.mrb[0].mxu0
    %v208 = vpop.f32.mrb[0].mxu0
    %v209 = vpop.f32.mrb[0].mxu0
    %210 = vdwg.mxu0
    %v227 = vunpack.c.l.b16 %v62
    %v228 = vunpack.c.l.b16 %v63
    %v229 = vunpack.c.l.b16 %v64
    %v230 = vunpack.c.l.b16 %v65
    %v231 = vunpack.c.l.b16 %v66
    %v232 = vunpack.c.l.b16 %v67
    %v233 = vunpack.c.l.b16 %v68
    %v234 = vunpack.c.l.b16 %v69
    %v235 = vunpack.c.l.b16 %v70
    %v236 = vunpack.c.l.b16 %v71
    %v237 = vunpack.c.l.b16 %v72
    %v238 = vunpack.c.l.b16 %v73
    %v239 = vunpack.c.l.b16 %v74
    %v240 = vunpack.c.l.b16 %v75
    %v241 = vunpack.c.l.b16 %v76
    %v242 = vunpack.c.l.b16 %v77
    %v243 = vpack.c.b16 %v228, %v227
    %v244 = vpack.c.b16 %v230, %v229
    %v245 = vpack.c.b16 %v232, %v231
    %v246 = vpack.c.b16 %v234, %v233
    %v247 = vpack.c.b16 %v236, %v235
    %v248 = vpack.c.b16 %v238, %v237
    %v249 = vpack.c.b16 %v240, %v239
    %v250 = vpack.c.b16 %v242, %v241
    %259 = vmatprep.subr.bf16.mxu0 0
    %260 = vmatpush1.bf16.msra.mxu0 %v243
    %261 = vmatprep.subr.bf16.mxu0 0
    %262 = vmatpush1.bf16.msra.mxu0 %v244
    %263 = vmatprep.subr.bf16.mxu0 0
    %264 = vmatpush1.bf16.msra.mxu0 %v245
    %265 = vmatprep.subr.bf16.mxu0 0
    %266 = vmatpush1.bf16.msra.mxu0 %v246
    %267 = vmatprep.subr.bf16.mxu0 0
    %268 = vmatpush1.bf16.msra.mxu0 %v247
    %269 = vmatprep.subr.bf16.mxu0 0
    %270 = vmatpush1.bf16.msra.mxu0 %v248
    %271 = vmatprep.subr.bf16.mxu0 0
    %272 = vmatpush1.bf16.msra.mxu0 %v249
    %273 = vmatprep.subr.bf16.mxu0 0
    %274 = vmatpush1.bf16.msra.mxu0 %v250
    %275 = vmatprep.subr.bf16.mxu0 0
    %276 = vmatpush1.bf16.msra.mxu0 0
    %277 = vmatprep.subr.bf16.mxu0 0
    %278 = vmatpush1.bf16.msra.mxu0 0
    %279 = vmatprep.subr.bf16.mxu0 0
    %280 = vmatpush1.bf16.msra.mxu0 0
    %281 = vmatprep.subr.bf16.mxu0 0
    %282 = vmatpush1.bf16.msra.mxu0 0
    %283 = vmatprep.subr.bf16.mxu0 0
    %284 = vmatpush1.bf16.msra.mxu0 0
    %285 = vmatprep.subr.bf16.mxu0 0
    %286 = vmatpush1.bf16.msra.mxu0 0
    %287 = vmatprep.subr.bf16.mxu0 0
    %288 = vmatpush1.bf16.msra.mxu0 0
    %289 = vmatprep.subr.bf16.mxu0 0
    %290 = vmatpush1.bf16.msra.mxu0 0
    %291 = vmatprep.mubr.bf16.mxu0 0
    %292 = vmatmul.mubr.bf16.gmra.mrb[0].mxu0 %v121
    %v293 = vpop.f32.mrb[0].mxu0
    %v294 = vadd.f32 %v206, %v293
    %v295 = vpop.f32.mrb[0].mxu0
    %v296 = vpop.f32.mrb[0].mxu0
    %v297 = vpop.f32.mrb[0].mxu0
    %298 = vdwg.mxu0
    %v300 = vlaneseq
    %v301 = vshrl.u32 %v300, 7
    %v302 = vsub.s32 0, %v301
    %v303 = vrot.slane %v110, %v302
    %v305 = vadd.f32 %v294, %v303
    %v306 = vtanh.pop %v305
    %v307 = vpack.c.bf16 %v306, %v306
    %v309 = vlaneseq
    %v310 = vshrl.u32 %v309, 7
    %v311 = vsub.s32 0, %v310
    %v312 = vrot.slane %v111, %v311
    %v330 = vunpack.c.l.b16 %v94
    %v331 = vunpack.c.l.b16 %v95
    %v332 = vunpack.c.l.b16 %v96
    %v333 = vunpack.c.l.b16 %v97
    %v334 = vunpack.c.l.b16 %v98
    %v335 = vunpack.c.l.b16 %v99
    %v336 = vunpack.c.l.b16 %v100
    %v337 = vunpack.c.l.b16 %v101
    %v338 = vunpack.c.l.b16 %v102
    %v339 = vunpack.c.l.b16 %v103
    %v340 = vunpack.c.l.b16 %v104
    %v341 = vunpack.c.l.b16 %v105
    %v342 = vunpack.c.l.b16 %v106
    %v343 = vunpack.c.l.b16 %v107
    %v344 = vunpack.c.l.b16 %v108
    %v345 = vunpack.c.l.b16 %v109
    %v346 = vpack.c.b16 %v331, %v330
    %v347 = vpack.c.b16 %v333, %v332
    %v348 = vpack.c.b16 %v335, %v334
    %v349 = vpack.c.b16 %v337, %v336
    %v350 = vpack.c.b16 %v339, %v338
    %v351 = vpack.c.b16 %v341, %v340
    %v352 = vpack.c.b16 %v343, %v342
    %v353 = vpack.c.b16 %v345, %v344
    %362 = vmatprep.subr.bf16.mxu0 0
    %363 = vmatpush1.bf16.msra.mxu0 %v346
    %364 = vmatprep.subr.bf16.mxu0 0
    %365 = vmatpush1.bf16.msra.mxu0 %v347
    %366 = vmatprep.subr.bf16.mxu0 0
    %367 = vmatpush1.bf16.msra.mxu0 %v348
    %368 = vmatprep.subr.bf16.mxu0 0
    %369 = vmatpush1.bf16.msra.mxu0 %v349
    %370 = vmatprep.subr.bf16.mxu0 0
    %371 = vmatpush1.bf16.msra.mxu0 %v350
    %372 = vmatprep.subr.bf16.mxu0 0
    %373 = vmatpush1.bf16.msra.mxu0 %v351
    %374 = vmatprep.subr.bf16.mxu0 0
    %375 = vmatpush1.bf16.msra.mxu0 %v352
    %376 = vmatprep.subr.bf16.mxu0 0
    %377 = vmatpush1.bf16.msra.mxu0 %v353
    %378 = vmatprep.subr.bf16.mxu0 0
    %379 = vmatpush1.bf16.msra.mxu0 0
    %380 = vmatprep.subr.bf16.mxu0 0
    %381 = vmatpush1.bf16.msra.mxu0 0
    %382 = vmatprep.subr.bf16.mxu0 0
    %383 = vmatpush1.bf16.msra.mxu0 0
    %384 = vmatprep.subr.bf16.mxu0 0
    %385 = vmatpush1.bf16.msra.mxu0 0
    %386 = vmatprep.subr.bf16.mxu0 0
    %387 = vmatpush1.bf16.msra.mxu0 0
    %388 = vmatprep.subr.bf16.mxu0 0
    %389 = vmatpush1.bf16.msra.mxu0 0
    %390 = vmatprep.subr.bf16.mxu0 0
    %391 = vmatpush1.bf16.msra.mxu0 0
    %392 = vmatprep.subr.bf16.mxu0 0
    %393 = vmatpush1.bf16.msra.mxu0 0
    %394 = vmatprep.mubr.bf16.mxu0 0
    %395 = vmatmul.mubr.bf16.gmra.mrb[0].mxu0 %v307
    %v396 = vpop.f32.mrb[0].mxu0
    %v397 = vadd.f32 %v312, %v396
    %v398 = vpop.f32.mrb[0].mxu0
    %v399 = vpop.f32.mrb[0].mxu0
    %v400 = vpop.f32.mrb[0].mxu0
    %401 = vdwg.mxu0
    %v403 = vcombine.high %v397, %v397
    %v405 = vunpack.c.l.s4 1966171168
    %v406 = vunpack.c.0.s8 %v405
    %v407 = vlaneseq
    %v408 = vshrl.u32 %v407, 7
    %v409 = vsub.s32 %v406, %v408
    %v410 = vrot.slane %v397, %v409
    %v412 = vunpack.c.l.s4 1966171168
    %v413 = vunpack.c.0.s8 %v412
    %v414 = vlaneseq
    %v415 = vshrl.u32 %v414, 7
    %v416 = vsub.s32 %v413, %v415
    %v417 = vrot.slane %v403, %v416
    %v418 = vcombine.high %v410, %v410
    %v419 = vcombine.high %v417, %v417
    %v421 = vunpack.c.l.s4 1966171168
    %v422 = vunpack.c.0.s8 %v421
    %v423 = vlaneseq
    %v424 = vshrl.u32 %v423, 7
    %v425 = vsub.s32 %v422, %v424
    %v426 = vrot.slane %v410, %v425
    %v428 = vunpack.c.l.s4 1966171168
    %v429 = vunpack.c.0.s8 %v428
    %v430 = vlaneseq
    %v431 = vshrl.u32 %v430, 7
    %v432 = vsub.s32 %v429, %v431
    %v433 = vrot.slane %v417, %v432
    %v435 = vunpack.c.l.s4 1966171168
    %v436 = vunpack.c.0.s8 %v435
    %v437 = vlaneseq
    %v438 = vshrl.u32 %v437, 7
    %v439 = vsub.s32 %v436, %v438
    %v440 = vrot.slane %v418, %v439
    %v442 = vunpack.c.l.s4 1966171168
    %v443 = vunpack.c.0.s8 %v442
    %v444 = vlaneseq
    %v445 = vshrl.u32 %v444, 7
    %v446 = vsub.s32 %v443, %v445
    %v447 = vrot.slane %v419, %v446
    %v448 = vcombine.high %v426, %v426
    %v449 = vcombine.high %v433, %v433
    %v450 = vcombine.high %v440, %v440
    %v451 = vcombine.high %v447, %v447
    %460 = vst [vmem:[#allocation8] sm:$0x1] %v426
    %461 = vst [vmem:[#allocation8 + $0x8] sm:$0x1] %v440
    %462 = vst [vmem:[#allocation8 + $0x10] sm:$0x1] %v448
    %463 = vst [vmem:[#allocation8 + $0x18] sm:$0x1] %v450
    %464 = vst [vmem:[#allocation8 + $0x20] sm:$0x1] %v433
    %465 = vst [vmem:[#allocation8 + $0x28] sm:$0x1] %v447
    %466 = vst [vmem:[#allocation8 + $0x30] sm:$0x1] %v449
    %467 = vst [vmem:[#allocation8 + $0x38] sm:$0x1] %v451
    %s468 = scalar_lea.vmem %s0, 8
    %v469 = vld [vmem:[%s468] sm:$0xff]
    %470 = vset.pattern.permute.xlu0 0
    %471 = vperm.xlu0 %470, %v469
    %v472 = vpop.permute.xlu0 %471
    %vm473 = vcmp.eq.s32.totalorder %v472, %v113
    %v474 = vsel %vm473, 1.0, 0.0
    %v475 = vpack.c.bf16 %v474, %v474
    %476 = vmatprep.subr.bf16.mxu0 0
    %477 = vmatpush1.bf16.msra.mxu0 %v155
    %478 = vmatprep.subr.bf16.mxu0 0
    %479 = vmatpush1.bf16.msra.mxu0 %v156
    %480 = vmatprep.subr.bf16.mxu0 0
    %481 = vmatpush1.bf16.msra.mxu0 %v157
    %482 = vmatprep.subr.bf16.mxu0 0
    %483 = vmatpush1.bf16.msra.mxu0 %v158
    %484 = vmatprep.subr.bf16.mxu0 0
    %485 = vmatpush1.bf16.msra.mxu0 %v159
    %486 = vmatprep.subr.bf16.mxu0 0
    %487 = vmatpush1.bf16.msra.mxu0 %v160
    %488 = vmatprep.subr.bf16.mxu0 0
    %489 = vmatpush1.bf16.msra.mxu0 %v161
    %490 = vmatprep.subr.bf16.mxu0 0
    %491 = vmatpush1.bf16.msra.mxu0 %v162
    %492 = vmatprep.subr.bf16.mxu0 0
    %493 = vmatpush1.bf16.msra.mxu0 0
    %494 = vmatprep.subr.bf16.mxu0 0
    %495 = vmatpush1.bf16.msra.mxu0 0
    %496 = vmatprep.subr.bf16.mxu0 0
    %497 = vmatpush1.bf16.msra.mxu0 0
    %498 = vmatprep.subr.bf16.mxu0 0
    %499 = vmatpush1.bf16.msra.mxu0 0
    %500 = vmatprep.subr.bf16.mxu0 0
    %501 = vmatpush1.bf16.msra.mxu0 0
    %502 = vmatprep.subr.bf16.mxu0 0
    %503 = vmatpush1.bf16.msra.mxu0 0
    %504 = vmatprep.subr.bf16.mxu0 0
    %505 = vmatpush1.bf16.msra.mxu0 0
    %506 = vmatprep.subr.bf16.mxu0 0
    %507 = vmatpush1.bf16.msra.mxu0 0
    %508 = vmatprep.mubr.bf16.mxu0 0
    %509 = vmatmul.mubr.bf16.gmra.mrb[0].mxu0 %v307
    %v510 = vpop.f32.mrb[0].mxu0
    %v511 = vadd.f32 0.0, %v510
    %v512 = vpop.f32.mrb[0].mxu0
    %v513 = vpop.f32.mrb[0].mxu0
    %v514 = vpop.f32.mrb[0].mxu0
    %515 = vdwg.mxu0
    %516 = vmatprep.subr.bf16.mxu0 0
    %517 = vmatpush1.bf16.msra.mxu0 %v243
    %518 = vmatprep.subr.bf16.mxu0 0
    %519 = vmatpush1.bf16.msra.mxu0 %v244
    %520 = vmatprep.subr.bf16.mxu0 0
    %521 = vmatpush1.bf16.msra.mxu0 %v245
    %522 = vmatprep.subr.bf16.mxu0 0
    %523 = vmatpush1.bf16.msra.mxu0 %v246
    %524 = vmatprep.subr.bf16.mxu0 0
    %525 = vmatpush1.bf16.msra.mxu0 %v247
    %526 = vmatprep.subr.bf16.mxu0 0
    %527 = vmatpush1.bf16.msra.mxu0 %v248
    %528 = vmatprep.subr.bf16.mxu0 0
    %529 = vmatpush1.bf16.msra.mxu0 %v249
    %530 = vmatprep.subr.bf16.mxu0 0
    %531 = vmatpush1.bf16.msra.mxu0 %v250
    %532 = vmatprep.subr.bf16.mxu0 0
    %533 = vmatpush1.bf16.msra.mxu0 0
    %534 = vmatprep.subr.bf16.mxu0 0
    %535 = vmatpush1.bf16.msra.mxu0 0
    %536 = vmatprep.subr.bf16.mxu0 0
    %537 = vmatpush1.bf16.msra.mxu0 0
    %538 = vmatprep.subr.bf16.mxu0 0
    %539 = vmatpush1.bf16.msra.mxu0 0
    %540 = vmatprep.subr.bf16.mxu0 0
    %541 = vmatpush1.bf16.msra.mxu0 0
    %542 = vmatprep.subr.bf16.mxu0 0
    %543 = vmatpush1.bf16.msra.mxu0 0
    %544 = vmatprep.subr.bf16.mxu0 0
    %545 = vmatpush1.bf16.msra.mxu0 0
    %546 = vmatprep.subr.bf16.mxu0 0
    %547 = vmatpush1.bf16.msra.mxu0 0
    %548 = vmatprep.mubr.bf16.mxu0 0
    %549 = vmatmul.mubr.bf16.gmra.mrb[0].mxu0 %v475
    %v550 = vpop.f32.mrb[0].mxu0
    %v551 = vadd.f32 %v511, %v550
    %v552 = vpop.f32.mrb[0].mxu0
    %v553 = vpop.f32.mrb[0].mxu0
    %v554 = vpop.f32.mrb[0].mxu0
    %555 = vdwg.mxu0
    %v556 = vadd.f32 %v551, %v303
    %v557 = vtanh.pop %v556
    %v558 = vpack.c.bf16 %v557, %v557
    %559 = vmatprep.subr.bf16.mxu0 0
    %560 = vmatpush1.bf16.msra.mxu0 %v346
    %561 = vmatprep.subr.bf16.mxu0 0
    %562 = vmatpush1.bf16.msra.mxu0 %v347
    %563 = vmatprep.subr.bf16.mxu0 0
    %564 = vmatpush1.bf16.msra.mxu0 %v348
    %565 = vmatprep.subr.bf16.mxu0 0
    %566 = vmatpush1.bf16.msra.mxu0 %v349
    %567 = vmatprep.subr.bf16.mxu0 0
    %568 = vmatpush1.bf16.msra.mxu0 %v350
    %569 = vmatprep.subr.bf16.mxu0 0
    %570 = vmatpush1.bf16.msra.mxu0 %v351
    %571 = vmatprep.subr.bf16.mxu0 0
    %572 = vmatpush1.bf16.msra.mxu0 %v352
    %573 = vmatprep.subr.bf16.mxu0 0
    %574 = vmatpush1.bf16.msra.mxu0 %v353
    %575 = vmatprep.subr.bf16.mxu0 0
    %576 = vmatpush1.bf16.msra.mxu0 0
    %577 = vmatprep.subr.bf16.mxu0 0
    %578 = vmatpush1.bf16.msra.mxu0 0
    %579 = vmatprep.subr.bf16.mxu0 0
    %580 = vmatpush1.bf16.msra.mxu0 0
    %581 = vmatprep.subr.bf16.mxu0 0
    %582 = vmatpush1.bf16.msra.mxu0 0
    %583 = vmatprep.subr.bf16.mxu0 0
    %584 = vmatpush1.bf16.msra.mxu0 0
    %585 = vmatprep.subr.bf16.mxu0 0
    %586 = vmatpush1.bf16.msra.mxu0 0
    %587 = vmatprep.subr.bf16.mxu0 0
    %588 = vmatpush1.bf16.msra.mxu0 0
    %589 = vmatprep.subr.bf16.mxu0 0
    %590 = vmatpush1.bf16.msra.mxu0 0
    %591 = vmatprep.mubr.bf16.mxu0 0
    %592 = vmatmul.mubr.bf16.gmra.mrb[0].mxu0 %v558
    %v593 = vpop.f32.mrb[0].mxu0
    %v594 = vadd.f32 %v312, %v593
    %v595 = vpop.f32.mrb[0].mxu0
    %v596 = vpop.f32.mrb[0].mxu0
    %v597 = vpop.f32.mrb[0].mxu0
    %598 = vdwg.mxu0
    %v600 = vcombine.high %v594, %v594
    %v602 = vunpack.c.l.s4 1966171168
    %v603 = vunpack.c.0.s8 %v602
    %v604 = vlaneseq
    %v605 = vshrl.u32 %v604, 7
    %v606 = vsub.s32 %v603, %v605
    %v607 = vrot.slane %v594, %v606
    %v609 = vunpack.c.l.s4 1966171168
    %v610 = vunpack.c.0.s8 %v609
    %v611 = vlaneseq
    %v612 = vshrl.u32 %v611, 7
    %v613 = vsub.s32 %v610, %v612
    %v614 = vrot.slane %v600, %v613
    %v615 = vcombine.high %v607, %v607
    %v616 = vcombine.high %v614, %v614
    %v618 = vunpack.c.l.s4 1966171168
    %v619 = vunpack.c.0.s8 %v618
    %v620 = vlaneseq
    %v621 = vshrl.u32 %v620, 7
    %v622 = vsub.s32 %v619, %v621
    %v623 = vrot.slane %v607, %v622
    %v625 = vunpack.c.l.s4 1966171168
    %v626 = vunpack.c.0.s8 %v625
    %v627 = vlaneseq
    %v628 = vshrl.u32 %v627, 7
    %v629 = vsub.s32 %v626, %v628
    %v630 = vrot.slane %v614, %v629
    %v632 = vunpack.c.l.s4 1966171168
    %v633 = vunpack.c.0.s8 %v632
    %v634 = vlaneseq
    %v635 = vshrl.u32 %v634, 7
    %v636 = vsub.s32 %v633, %v635
    %v637 = vrot.slane %v615, %v636
    %v639 = vunpack.c.l.s4 1966171168
    %v640 = vunpack.c.0.s8 %v639
    %v641 = vlaneseq
    %v642 = vshrl.u32 %v641, 7
    %v643 = vsub.s32 %v640, %v642
    %v644 = vrot.slane %v616, %v643
    %v645 = vcombine.high %v623, %v623
    %v646 = vcombine.high %v630, %v630
    %v647 = vcombine.high %v637, %v637
    %v648 = vcombine.high %v644, %v644
    %657 = vst [vmem:[#allocation8 + $0x1] sm:$0x1] %v623
    %658 = vst [vmem:[#allocation8 + $0x9] sm:$0x1] %v637
    %659 = vst [vmem:[#allocation8 + $0x11] sm:$0x1] %v645
    %660 = vst [vmem:[#allocation8 + $0x19] sm:$0x1] %v647
    %661 = vst [vmem:[#allocation8 + $0x21] sm:$0x1] %v630
    %662 = vst [vmem:[#allocation8 + $0x29] sm:$0x1] %v644
    %663 = vst [vmem:[#allocation8 + $0x31] sm:$0x1] %v646
    %664 = vst [vmem:[#allocation8 + $0x39] sm:$0x1] %v648
    %s665 = scalar_lea.vmem %s0, 16
    %v666 = vld [vmem:[%s665] sm:$0xff]
    %667 = vset.pattern.permute.xlu0 0
    %668 = vperm.xlu0 %667, %v666
    %v669 = vpop.permute.xlu0 %668
    %vm670 = vcmp.eq.s32.totalorder %v669, %v113
    %v671 = vsel %vm670, 1.0, 0.0
    %v672 = vpack.c.bf16 %v671, %v671
    %673 = vmatprep.subr.bf16.mxu0 0
    %674 = vmatpush1.bf16.msra.mxu0 %v155
    %675 = vmatprep.subr.bf16.mxu0 0
    %676 = vmatpush1.bf16.msra.mxu0 %v156
    %677 = vmatprep.subr.bf16.mxu0 0
    %678 = vmatpush1.bf16.msra.mxu0 %v157
    %679 = vmatprep.subr.bf16.mxu0 0
    %680 = vmatpush1.bf16.msra.mxu0 %v158
    %681 = vmatprep.subr.bf16.mxu0 0
    %682 = vmatpush1.bf16.msra.mxu0 %v159
    %683 = vmatprep.subr.bf16.mxu0 0
    %684 = vmatpush1.bf16.msra.mxu0 %v160
    %685 = vmatprep.subr.bf16.mxu0 0
    %686 = vmatpush1.bf16.msra.mxu0 %v161
    %687 = vmatprep.subr.bf16.mxu0 0
    %688 = vmatpush1.bf16.msra.mxu0 %v162
    %689 = vmatprep.subr.bf16.mxu0 0
    %690 = vmatpush1.bf16.msra.mxu0 0
    %691 = vmatprep.subr.bf16.mxu0 0
    %692 = vmatpush1.bf16.msra.mxu0 0
    %693 = vmatprep.subr.bf16.mxu0 0
    %694 = vmatpush1.bf16.msra.mxu0 0
    %695 = vmatprep.subr.bf16.mxu0 0
    %696 = vmatpush1.bf16.msra.mxu0 0
    %697 = vmatprep.subr.bf16.mxu0 0
    %698 = vmatpush1.bf16.msra.mxu0 0
    %699 = vmatprep.subr.bf16.mxu0 0
    %700 = vmatpush1.bf16.msra.mxu0 0
    %701 = vmatprep.subr.bf16.mxu0 0
    %702 = vmatpush1.bf16.msra.mxu0 0
    %703 = vmatprep.subr.bf16.mxu0 0
    %704 = vmatpush1.bf16.msra.mxu0 0
    %705 = vmatprep.mubr.bf16.mxu0 0
    %706 = vmatmul.mubr.bf16.gmra.mrb[0].mxu0 %v558
    %v707 = vpop.f32.mrb[0].mxu0
    %v708 = vadd.f32 0.0, %v707
    %v709 = vpop.f32.mrb[0].mxu0
    %v710 = vpop.f32.mrb[0].mxu0
    %v711 = vpop.f32.mrb[0].mxu0
    %712 = vdwg.mxu0
    %713 = vmatprep.subr.bf16.mxu0 0
    %714 = vmatpush1.bf16.msra.mxu0 %v243
    %715 = vmatprep.subr.bf16.mxu0 0
    %716 = vmatpush1.bf16.msra.mxu0 %v244
    %717 = vmatprep.subr.bf16.mxu0 0
    %718 = vmatpush1.bf16.msra.mxu0 %v245
    %719 = vmatprep.subr.bf16.mxu0 0
    %720 = vmatpush1.bf16.msra.mxu0 %v246
    %721 = vmatprep.subr.bf16.mxu0 0
    %722 = vmatpush1.bf16.msra.mxu0 %v247
    %723 = vmatprep.subr.bf16.mxu0 0
    %724 = vmatpush1.bf16.msra.mxu0 %v248
    %725 = vmatprep.subr.bf16.mxu0 0
    %726 = vmatpush1.bf16.msra.mxu0 %v249
    %727 = vmatprep.subr.bf16.mxu0 0
    %728 = vmatpush1.bf16.msra.mxu0 %v250
    %729 = vmatprep.subr.bf16.mxu0 0
    %730 = vmatpush1.bf16.msra.mxu0 0
    %731 = vmatprep.subr.bf16.mxu0 0
    %732 = vmatpush1.bf16.msra.mxu0 0
    %733 = vmatprep.subr.bf16.mxu0 0
    %734 = vmatpush1.bf16.msra.mxu0 0
    %735 = vmatprep.subr.bf16.mxu0 0
    %736 = vmatpush1.bf16.msra.mxu0 0
    %737 = vmatprep.subr.bf16.mxu0 0
    %738 = vmatpush1.bf16.msra.mxu0 0
    %739 = vmatprep.subr.bf16.mxu0 0
    %740 = vmatpush1.bf16.msra.mxu0 0
    %741 = vmatprep.subr.bf16.mxu0 0
    %742 = vmatpush1.bf16.msra.mxu0 0
    %743 = vmatprep.subr.bf16.mxu0 0
    %744 = vmatpush1.bf16.msra.mxu0 0
    %745 = vmatprep.mubr.bf16.mxu0 0
    %746 = vmatmul.mubr.bf16.gmra.mrb[0].mxu0 %v672
    %v747 = vpop.f32.mrb[0].mxu0
    %v748 = vadd.f32 %v708, %v747
    %v749 = vpop.f32.mrb[0].mxu0
    %v750 = vpop.f32.mrb[0].mxu0
    %v751 = vpop.f32.mrb[0].mxu0
    %752 = vdwg.mxu0
    %v753 = vadd.f32 %v748, %v303
    %v754 = vtanh.pop %v753
    %v755 = vpack.c.bf16 %v754, %v754
    %756 = vmatprep.subr.bf16.mxu0 0
    %757 = vmatpush1.bf16.msra.mxu0 %v346
    %758 = vmatprep.subr.bf16.mxu0 0
    %759 = vmatpush1.bf16.msra.mxu0 %v347
    %760 = vmatprep.subr.bf16.mxu0 0
    %761 = vmatpush1.bf16.msra.mxu0 %v348
    %762 = vmatprep.subr.bf16.mxu0 0
    %763 = vmatpush1.bf16.msra.mxu0 %v349
    %764 = vmatprep.subr.bf16.mxu0 0
    %765 = vmatpush1.bf16.msra.mxu0 %v350
    %766 = vmatprep.subr.bf16.mxu0 0
    %767 = vmatpush1.bf16.msra.mxu0 %v351
    %768 = vmatprep.subr.bf16.mxu0 0
    %769 = vmatpush1.bf16.msra.mxu0 %v352
    %770 = vmatprep.subr.bf16.mxu0 0
    %771 = vmatpush1.bf16.msra.mxu0 %v353
    %772 = vmatprep.subr.bf16.mxu0 0
    %773 = vmatpush1.bf16.msra.mxu0 0
    %774 = vmatprep.subr.bf16.mxu0 0
    %775 = vmatpush1.bf16.msra.mxu0 0
    %776 = vmatprep.subr.bf16.mxu0 0
    %777 = vmatpush1.bf16.msra.mxu0 0
    %778 = vmatprep.subr.bf16.mxu0 0
    %779 = vmatpush1.bf16.msra.mxu0 0
    %780 = vmatprep.subr.bf16.mxu0 0
    %781 = vmatpush1.bf16.msra.mxu0 0
    %782 = vmatprep.subr.bf16.mxu0 0
    %783 = vmatpush1.bf16.msra.mxu0 0
    %784 = vmatprep.subr.bf16.mxu0 0
    %785 = vmatpush1.bf16.msra.mxu0 0
    %786 = vmatprep.subr.bf16.mxu0 0
    %787 = vmatpush1.bf16.msra.mxu0 0
    %788 = vmatprep.mubr.bf16.mxu0 0
    %789 = vmatmul.mubr.bf16.gmra.mrb[0].mxu0 %v755
    %v790 = vpop.f32.mrb[0].mxu0
    %v791 = vadd.f32 %v312, %v790
    %v792 = vpop.f32.mrb[0].mxu0
    %v793 = vpop.f32.mrb[0].mxu0
    %v794 = vpop.f32.mrb[0].mxu0
    %795 = vdwg.mxu0
    %v797 = vcombine.high %v791, %v791
    %v799 = vunpack.c.l.s4 1966171168
    %v800 = vunpack.c.0.s8 %v799
    %v801 = vlaneseq
    %v802 = vshrl.u32 %v801, 7
    %v803 = vsub.s32 %v800, %v802
    %v804 = vrot.slane %v791, %v803
    %v806 = vunpack.c.l.s4 1966171168
    %v807 = vunpack.c.0.s8 %v806
    %v808 = vlaneseq
    %v809 = vshrl.u32 %v808, 7
    %v810 = vsub.s32 %v807, %v809
    %v811 = vrot.slane %v797, %v810
    %v812 = vcombine.high %v804, %v804
    %v813 = vcombine.high %v811, %v811
    %v815 = vunpack.c.l.s4 1966171168
    %v816 = vunpack.c.0.s8 %v815
    %v817 = vlaneseq
    %v818 = vshrl.u32 %v817, 7
    %v819 = vsub.s32 %v816, %v818
    %v820 = vrot.slane %v804, %v819
    %v822 = vunpack.c.l.s4 1966171168
    %v823 = vunpack.c.0.s8 %v822
    %v824 = vlaneseq
    %v825 = vshrl.u32 %v824, 7
    %v826 = vsub.s32 %v823, %v825
    %v827 = vrot.slane %v811, %v826
    %v829 = vunpack.c.l.s4 1966171168
    %v830 = vunpack.c.0.s8 %v829
    %v831 = vlaneseq
    %v832 = vshrl.u32 %v831, 7
    %v833 = vsub.s32 %v830, %v832
    %v834 = vrot.slane %v812, %v833
    %v836 = vunpack.c.l.s4 1966171168
    %v837 = vunpack.c.0.s8 %v836
    %v838 = vlaneseq
    %v839 = vshrl.u32 %v838, 7
    %v840 = vsub.s32 %v837, %v839
    %v841 = vrot.slane %v813, %v840
    %v842 = vcombine.high %v820, %v820
    %v843 = vcombine.high %v827, %v827
    %v844 = vcombine.high %v834, %v834
    %v845 = vcombine.high %v841, %v841
    %854 = vst [vmem:[#allocation8 + $0x2] sm:$0x1] %v820
    %855 = vst [vmem:[#allocation8 + $0xa] sm:$0x1] %v834
    %856 = vst [vmem:[#allocation8 + $0x12] sm:$0x1] %v842
    %857 = vst [vmem:[#allocation8 + $0x1a] sm:$0x1] %v844
    %858 = vst [vmem:[#allocation8 + $0x22] sm:$0x1] %v827
    %859 = vst [vmem:[#allocation8 + $0x2a] sm:$0x1] %v841
    %860 = vst [vmem:[#allocation8 + $0x32] sm:$0x1] %v843
    %861 = vst [vmem:[#allocation8 + $0x3a] sm:$0x1] %v845
    %s862 = scalar_lea.vmem %s0, 24
    %v863 = vld [vmem:[%s862] sm:$0xff]
    %864 = vset.pattern.permute.xlu0 0
    %865 = vperm.xlu0 %864, %v863
    %v866 = vpop.permute.xlu0 %865
    %vm867 = vcmp.eq.s32.totalorder %v866, %v113
    %v868 = vsel %vm867, 1.0, 0.0
    %v869 = vpack.c.bf16 %v868, %v868
    %870 = vmatprep.subr.bf16.mxu0 0
    %871 = vmatpush1.bf16.msra.mxu0 %v155
    %872 = vmatprep.subr.bf16.mxu0 0
    %873 = vmatpush1.bf16.msra.mxu0 %v156
    %874 = vmatprep.subr.bf16.mxu0 0
    %875 = vmatpush1.bf16.msra.mxu0 %v157
    %876 = vmatprep.subr.bf16.mxu0 0
    %877 = vmatpush1.bf16.msra.mxu0 %v158
    %878 = vmatprep.subr.bf16.mxu0 0
    %879 = vmatpush1.bf16.msra.mxu0 %v159
    %880 = vmatprep.subr.bf16.mxu0 0
    %881 = vmatpush1.bf16.msra.mxu0 %v160
    %882 = vmatprep.subr.bf16.mxu0 0
    %883 = vmatpush1.bf16.msra.mxu0 %v161
    %884 = vmatprep.subr.bf16.mxu0 0
    %885 = vmatpush1.bf16.msra.mxu0 %v162
    %886 = vmatprep.subr.bf16.mxu0 0
    %887 = vmatpush1.bf16.msra.mxu0 0
    %888 = vmatprep.subr.bf16.mxu0 0
    %889 = vmatpush1.bf16.msra.mxu0 0
    %890 = vmatprep.subr.bf16.mxu0 0
    %891 = vmatpush1.bf16.msra.mxu0 0
    %892 = vmatprep.subr.bf16.mxu0 0
    %893 = vmatpush1.bf16.msra.mxu0 0
    %894 = vmatprep.subr.bf16.mxu0 0
    %895 = vmatpush1.bf16.msra.mxu0 0
    %896 = vmatprep.subr.bf16.mxu0 0
    %897 = vmatpush1.bf16.msra.mxu0 0
    %898 = vmatprep.subr.bf16.mxu0 0
    %899 = vmatpush1.bf16.msra.mxu0 0
    %900 = vmatprep.subr.bf16.mxu0 0
    %901 = vmatpush1.bf16.msra.mxu0 0
    %902 = vmatprep.mubr.bf16.mxu0 0
    %903 = vmatmul.mubr.bf16.gmra.mrb[0].mxu0 %v755
    %v904 = vpop.f32.mrb[0].mxu0
    %v905 = vadd.f32 0.0, %v904
    %v906 = vpop.f32.mrb[0].mxu0
    %v907 = vpop.f32.mrb[0].mxu0
    %v908 = vpop.f32.mrb[0].mxu0
    %909 = vdwg.mxu0
    %910 = vmatprep.subr.bf16.mxu0 0
    %911 = vmatpush1.bf16.msra.mxu0 %v243
    %912 = vmatprep.subr.bf16.mxu0 0
    %913 = vmatpush1.bf16.msra.mxu0 %v244
    %914 = vmatprep.subr.bf16.mxu0 0
    %915 = vmatpush1.bf16.msra.mxu0 %v245
    %916 = vmatprep.subr.bf16.mxu0 0
    %917 = vmatpush1.bf16.msra.mxu0 %v246
    %918 = vmatprep.subr.bf16.mxu0 0
    %919 = vmatpush1.bf16.msra.mxu0 %v247
    %920 = vmatprep.subr.bf16.mxu0 0
    %921 = vmatpush1.bf16.msra.mxu0 %v248
    %922 = vmatprep.subr.bf16.mxu0 0
    %923 = vmatpush1.bf16.msra.mxu0 %v249
    %924 = vmatprep.subr.bf16.mxu0 0
    %925 = vmatpush1.bf16.msra.mxu0 %v250
    %926 = vmatprep.subr.bf16.mxu0 0
    %927 = vmatpush1.bf16.msra.mxu0 0
    %928 = vmatprep.subr.bf16.mxu0 0
    %929 = vmatpush1.bf16.msra.mxu0 0
    %930 = vmatprep.subr.bf16.mxu0 0
    %931 = vmatpush1.bf16.msra.mxu0 0
    %932 = vmatprep.subr.bf16.mxu0 0
    %933 = vmatpush1.bf16.msra.mxu0 0
    %934 = vmatprep.subr.bf16.mxu0 0
    %935 = vmatpush1.bf16.msra.mxu0 0
    %936 = vmatprep.subr.bf16.mxu0 0
    %937 = vmatpush1.bf16.msra.mxu0 0
    %938 = vmatprep.subr.bf16.mxu0 0
    %939 = vmatpush1.bf16.msra.mxu0 0
    %940 = vmatprep.subr.bf16.mxu0 0
    %941 = vmatpush1.bf16.msra.mxu0 0
    %942 = vmatprep.mubr.bf16.mxu0 0
    %943 = vmatmul.mubr.bf16.gmra.mrb[0].mxu0 %v869
    %v944 = vpop.f32.mrb[0].mxu0
    %v945 = vadd.f32 %v905, %v944
    %v946 = vpop.f32.mrb[0].mxu0
    %v947 = vpop.f32.mrb[0].mxu0
    %v948 = vpop.f32.mrb[0].mxu0
    %949 = vdwg.mxu0
    %v950 = vadd.f32 %v945, %v303
    %v951 = vtanh.pop %v950
    %v952 = vpack.c.bf16 %v951, %v951
    %953 = vmatprep.subr.bf16.mxu0 0
    %954 = vmatpush1.bf16.msra.mxu0 %v346
    %955 = vmatprep.subr.bf16.mxu0 0
    %956 = vmatpush1.bf16.msra.mxu0 %v347
    %957 = vmatprep.subr.bf16.mxu0 0
    %958 = vmatpush1.bf16.msra.mxu0 %v348
    %959 = vmatprep.subr.bf16.mxu0 0
    %960 = vmatpush1.bf16.msra.mxu0 %v349
    %961 = vmatprep.subr.bf16.mxu0 0
    %962 = vmatpush1.bf16.msra.mxu0 %v350
    %963 = vmatprep.subr.bf16.mxu0 0
    %964 = vmatpush1.bf16.msra.mxu0 %v351
    %965 = vmatprep.subr.bf16.mxu0 0
    %966 = vmatpush1.bf16.msra.mxu0 %v352
    %967 = vmatprep.subr.bf16.mxu0 0
    %968 = vmatpush1.bf16.msra.mxu0 %v353
    %969 = vmatprep.subr.bf16.mxu0 0
    %970 = vmatpush1.bf16.msra.mxu0 0
    %971 = vmatprep.subr.bf16.mxu0 0
    %972 = vmatpush1.bf16.msra.mxu0 0
    %973 = vmatprep.subr.bf16.mxu0 0
    %974 = vmatpush1.bf16.msra.mxu0 0
    %975 = vmatprep.subr.bf16.mxu0 0
    %976 = vmatpush1.bf16.msra.mxu0 0
    %977 = vmatprep.subr.bf16.mxu0 0
    %978 = vmatpush1.bf16.msra.mxu0 0
    %979 = vmatprep.subr.bf16.mxu0 0
    %980 = vmatpush1.bf16.msra.mxu0 0
    %981 = vmatprep.subr.bf16.mxu0 0
    %982 = vmatpush1.bf16.msra.mxu0 0
    %983 = vmatprep.subr.bf16.mxu0 0
    %984 = vmatpush1.bf16.msra.mxu0 0
    %985 = vmatprep.mubr.bf16.mxu0 0
    %986 = vmatmul.mubr.bf16.gmra.mrb[0].mxu0 %v952
    %v987 = vpop.f32.mrb[0].mxu0
    %v988 = vadd.f32 %v312, %v987
    %v989 = vpop.f32.mrb[0].mxu0
    %v990 = vpop.f32.mrb[0].mxu0
    %v991 = vpop.f32.mrb[0].mxu0
    %992 = vdwg.mxu0
    %v994 = vcombine.high %v988, %v988
    %v996 = vunpack.c.l.s4 1966171168
    %v997 = vunpack.c.0.s8 %v996
    %v998 = vlaneseq
    %v999 = vshrl.u32 %v998, 7
    %v1000 = vsub.s32 %v997, %v999
    %v1001 = vrot.slane %v988, %v1000
    %v1003 = vunpack.c.l.s4 1966171168
    %v1004 = vunpack.c.0.s8 %v1003
    %v1005 = vlaneseq
    %v1006 = vshrl.u32 %v1005, 7
    %v1007 = vsub.s32 %v1004, %v1006
    %v1008 = vrot.slane %v994, %v1007
    %v1009 = vcombine.high %v1001, %v1001
    %v1010 = vcombine.high %v1008, %v1008
    %v1012 = vunpack.c.l.s4 1966171168
    %v1013 = vunpack.c.0.s8 %v1012
    %v1014 = vlaneseq
    %v1015 = vshrl.u32 %v1014, 7
    %v1016 = vsub.s32 %v1013, %v1015
    %v1017 = vrot.slane %v1001, %v1016
    %v1019 = vunpack.c.l.s4 1966171168
    %v1020 = vunpack.c.0.s8 %v1019
    %v1021 = vlaneseq
    %v1022 = vshrl.u32 %v1021, 7
    %v1023 = vsub.s32 %v1020, %v1022
    %v1024 = vrot.slane %v1008, %v1023
    %v1026 = vunpack.c.l.s4 1966171168
    %v1027 = vunpack.c.0.s8 %v1026
    %v1028 = vlaneseq
    %v1029 = vshrl.u32 %v1028, 7
    %v1030 = vsub.s32 %v1027, %v1029
    %v1031 = vrot.slane %v1009, %v1030
    %v1033 = vunpack.c.l.s4 1966171168
    %v1034 = vunpack.c.0.s8 %v1033
    %v1035 = vlaneseq
    %v1036 = vshrl.u32 %v1035, 7
    %v1037 = vsub.s32 %v1034, %v1036
    %v1038 = vrot.slane %v1010, %v1037
    %v1039 = vcombine.high %v1017, %v1017
    %v1040 = vcombine.high %v1024, %v1024
    %v1041 = vcombine.high %v1031, %v1031
    %v1042 = vcombine.high %v1038, %v1038
    %1051 = vst [vmem:[#allocation8 + $0x3] sm:$0x1] %v1017
    %1052 = vst [vmem:[#allocation8 + $0xb] sm:$0x1] %v1031
    %1053 = vst [vmem:[#allocation8 + $0x13] sm:$0x1] %v1039
    %1054 = vst [vmem:[#allocation8 + $0x1b] sm:$0x1] %v1041
    %1055 = vst [vmem:[#allocation8 + $0x23] sm:$0x1] %v1024
    %1056 = vst [vmem:[#allocation8 + $0x2b] sm:$0x1] %v1038
    %1057 = vst [vmem:[#allocation8 + $0x33] sm:$0x1] %v1040
    %1058 = vst [vmem:[#allocation8 + $0x3b] sm:$0x1] %v1042
    %s1059 = scalar_lea.vmem %s0, 32
    %v1060 = vld [vmem:[%s1059] sm:$0xff]
    %1061 = vset.pattern.permute.xlu0 0
    %1062 = vperm.xlu0 %1061, %v1060
    %v1063 = vpop.permute.xlu0 %1062
    %vm1064 = vcmp.eq.s32.totalorder %v1063, %v113
    %v1065 = vsel %vm1064, 1.0, 0.0
    %v1066 = vpack.c.bf16 %v1065, %v1065
    %1067 = vmatprep.subr.bf16.mxu0 0
    %1068 = vmatpush1.bf16.msra.mxu0 %v155
    %1069 = vmatprep.subr.bf16.mxu0 0
    %1070 = vmatpush1.bf16.msra.mxu0 %v156
    %1071 = vmatprep.subr.bf16.mxu0 0
    %1072 = vmatpush1.bf16.msra.mxu0 %v157
    %1073 = vmatprep.subr.bf16.mxu0 0
    %1074 = vmatpush1.bf16.msra.mxu0 %v158
    %1075 = vmatprep.subr.bf16.mxu0 0
    %1076 = vmatpush1.bf16.msra.mxu0 %v159
    %1077 = vmatprep.subr.bf16.mxu0 0
    %1078 = vmatpush1.bf16.msra.mxu0 %v160
    %1079 = vmatprep.subr.bf16.mxu0 0
    %1080 = vmatpush1.bf16.msra.mxu0 %v161
    %1081 = vmatprep.subr.bf16.mxu0 0
    %1082 = vmatpush1.bf16.msra.mxu0 %v162
    %1083 = vmatprep.subr.bf16.mxu0 0
    %1084 = vmatpush1.bf16.msra.mxu0 0
    %1085 = vmatprep.subr.bf16.mxu0 0
    %1086 = vmatpush1.bf16.msra.mxu0 0
    %1087 = vmatprep.subr.bf16.mxu0 0
    %1088 = vmatpush1.bf16.msra.mxu0 0
    %1089 = vmatprep.subr.bf16.mxu0 0
    %1090 = vmatpush1.bf16.msra.mxu0 0
    %1091 = vmatprep.subr.bf16.mxu0 0
    %1092 = vmatpush1.bf16.msra.mxu0 0
    %1093 = vmatprep.subr.bf16.mxu0 0
    %1094 = vmatpush1.bf16.msra.mxu0 0
    %1095 = vmatprep.subr.bf16.mxu0 0
    %1096 = vmatpush1.bf16.msra.mxu0 0
    %1097 = vmatprep.subr.bf16.mxu0 0
    %1098 = vmatpush1.bf16.msra.mxu0 0
    %1099 = vmatprep.mubr.bf16.mxu0 0
    %1100 = vmatmul.mubr.bf16.gmra.mrb[0].mxu0 %v952
    %v1101 = vpop.f32.mrb[0].mxu0
    %v1102 = vadd.f32 0.0, %v1101
    %v1103 = vpop.f32.mrb[0].mxu0
    %v1104 = vpop.f32.mrb[0].mxu0
    %v1105 = vpop.f32.mrb[0].mxu0
    %1106 = vdwg.mxu0
    %1107 = vmatprep.subr.bf16.mxu0 0
    %1108 = vmatpush1.bf16.msra.mxu0 %v243
    %1109 = vmatprep.subr.bf16.mxu0 0
    %1110 = vmatpush1.bf16.msra.mxu0 %v244
    %1111 = vmatprep.subr.bf16.mxu0 0
    %1112 = vmatpush1.bf16.msra.mxu0 %v245
    %1113 = vmatprep.subr.bf16.mxu0 0
    %1114 = vmatpush1.bf16.msra.mxu0 %v246
    %1115 = vmatprep.subr.bf16.mxu0 0
    %1116 = vmatpush1.bf16.msra.mxu0 %v247
    %1117 = vmatprep.subr.bf16.mxu0 0
    %1118 = vmatpush1.bf16.msra.mxu0 %v248
    %1119 = vmatprep.subr.bf16.mxu0 0
    %1120 = vmatpush1.bf16.msra.mxu0 %v249
    %1121 = vmatprep.subr.bf16.mxu0 0
    %1122 = vmatpush1.bf16.msra.mxu0 %v250
    %1123 = vmatprep.subr.bf16.mxu0 0
    %1124 = vmatpush1.bf16.msra.mxu0 0
    %1125 = vmatprep.subr.bf16.mxu0 0
    %1126 = vmatpush1.bf16.msra.mxu0 0
    %1127 = vmatprep.subr.bf16.mxu0 0
    %1128 = vmatpush1.bf16.msra.mxu0 0
    %1129 = vmatprep.subr.bf16.mxu0 0
    %1130 = vmatpush1.bf16.msra.mxu0 0
    %1131 = vmatprep.subr.bf16.mxu0 0
    %1132 = vmatpush1.bf16.msra.mxu0 0
    %1133 = vmatprep.subr.bf16.mxu0 0
    %1134 = vmatpush1.bf16.msra.mxu0 0
    %1135 = vmatprep.subr.bf16.mxu0 0
    %1136 = vmatpush1.bf16.msra.mxu0 0
    %1137 = vmatprep.subr.bf16.mxu0 0
    %1138 = vmatpush1.bf16.msra.mxu0 0
    %1139 = vmatprep.mubr.bf16.mxu0 0
    %1140 = vmatmul.mubr.bf16.gmra.mrb[0].mxu0 %v1066
    %v1141 = vpop.f32.mrb[0].mxu0
    %v1142 = vadd.f32 %v1102, %v1141
    %v1143 = vpop.f32.mrb[0].mxu0
    %v1144 = vpop.f32.mrb[0].mxu0
    %v1145 = vpop.f32.mrb[0].mxu0
    %1146 = vdwg.mxu0
    %v1147 = vadd.f32 %v1142, %v303
    %v1148 = vtanh.pop %v1147
    %v1149 = vpack.c.bf16 %v1148, %v1148
    %1150 = vmatprep.subr.bf16.mxu0 0
    %1151 = vmatpush1.bf16.msra.mxu0 %v346
    %1152 = vmatprep.subr.bf16.mxu0 0
    %1153 = vmatpush1.bf16.msra.mxu0 %v347
    %1154 = vmatprep.subr.bf16.mxu0 0
    %1155 = vmatpush1.bf16.msra.mxu0 %v348
    %1156 = vmatprep.subr.bf16.mxu0 0
    %1157 = vmatpush1.bf16.msra.mxu0 %v349
    %1158 = vmatprep.subr.bf16.mxu0 0
    %1159 = vmatpush1.bf16.msra.mxu0 %v350
    %1160 = vmatprep.subr.bf16.mxu0 0
    %1161 = vmatpush1.bf16.msra.mxu0 %v351
    %1162 = vmatprep.subr.bf16.mxu0 0
    %1163 = vmatpush1.bf16.msra.mxu0 %v352
    %1164 = vmatprep.subr.bf16.mxu0 0
    %1165 = vmatpush1.bf16.msra.mxu0 %v353
    %1166 = vmatprep.subr.bf16.mxu0 0
    %1167 = vmatpush1.bf16.msra.mxu0 0
    %1168 = vmatprep.subr.bf16.mxu0 0
    %1169 = vmatpush1.bf16.msra.mxu0 0
    %1170 = vmatprep.subr.bf16.mxu0 0
    %1171 = vmatpush1.bf16.msra.mxu0 0
    %1172 = vmatprep.subr.bf16.mxu0 0
    %1173 = vmatpush1.bf16.msra.mxu0 0
    %1174 = vmatprep.subr.bf16.mxu0 0
    %1175 = vmatpush1.bf16.msra.mxu0 0
    %1176 = vmatprep.subr.bf16.mxu0 0
    %1177 = vmatpush1.bf16.msra.mxu0 0
    %1178 = vmatprep.subr.bf16.mxu0 0
    %1179 = vmatpush1.bf16.msra.mxu0 0
    %1180 = vmatprep.subr.bf16.mxu0 0
    %1181 = vmatpush1.bf16.msra.mxu0 0
    %1182 = vmatprep.mubr.bf16.mxu0 0
    %1183 = vmatmul.mubr.bf16.gmra.mrb[0].mxu0 %v1149
    %v1184 = vpop.f32.mrb[0].mxu0
    %v1185 = vadd.f32 %v312, %v1184
    %v1186 = vpop.f32.mrb[0].mxu0
    %v1187 = vpop.f32.mrb[0].mxu0
    %v1188 = vpop.f32.mrb[0].mxu0
    %1189 = vdwg.mxu0
    %v1191 = vcombine.high %v1185, %v1185
    %v1193 = vunpack.c.l.s4 1966171168
    %v1194 = vunpack.c.0.s8 %v1193
    %v1195 = vlaneseq
    %v1196 = vshrl.u32 %v1195, 7
    %v1197 = vsub.s32 %v1194, %v1196
    %v1198 = vrot.slane %v1185, %v1197
    %v1200 = vunpack.c.l.s4 1966171168
    %v1201 = vunpack.c.0.s8 %v1200
    %v1202 = vlaneseq
    %v1203 = vshrl.u32 %v1202, 7
    %v1204 = vsub.s32 %v1201, %v1203
    %v1205 = vrot.slane %v1191, %v1204
    %v1206 = vcombine.high %v1198, %v1198
    %v1207 = vcombine.high %v1205, %v1205
    %v1209 = vunpack.c.l.s4 1966171168
    %v1210 = vunpack.c.0.s8 %v1209
    %v1211 = vlaneseq
    %v1212 = vshrl.u32 %v1211, 7
    %v1213 = vsub.s32 %v1210, %v1212
    %v1214 = vrot.slane %v1198, %v1213
    %v1216 = vunpack.c.l.s4 1966171168
    %v1217 = vunpack.c.0.s8 %v1216
    %v1218 = vlaneseq
    %v1219 = vshrl.u32 %v1218, 7
    %v1220 = vsub.s32 %v1217, %v1219
    %v1221 = vrot.slane %v1205, %v1220
    %v1223 = vunpack.c.l.s4 1966171168
    %v1224 = vunpack.c.0.s8 %v1223
    %v1225 = vlaneseq
    %v1226 = vshrl.u32 %v1225, 7
    %v1227 = vsub.s32 %v1224, %v1226
    %v1228 = vrot.slane %v1206, %v1227
    %v1230 = vunpack.c.l.s4 1966171168
    %v1231 = vunpack.c.0.s8 %v1230
    %v1232 = vlaneseq
    %v1233 = vshrl.u32 %v1232, 7
    %v1234 = vsub.s32 %v1231, %v1233
    %v1235 = vrot.slane %v1207, %v1234
    %v1236 = vcombine.high %v1214, %v1214
    %v1237 = vcombine.high %v1221, %v1221
    %v1238 = vcombine.high %v1228, %v1228
    %v1239 = vcombine.high %v1235, %v1235
    %1248 = vst [vmem:[#allocation8 + $0x4] sm:$0x1] %v1214
    %1249 = vst [vmem:[#allocation8 + $0xc] sm:$0x1] %v1228
    %1250 = vst [vmem:[#allocation8 + $0x14] sm:$0x1] %v1236
    %1251 = vst [vmem:[#allocation8 + $0x1c] sm:$0x1] %v1238
    %1252 = vst [vmem:[#allocation8 + $0x24] sm:$0x1] %v1221
    %1253 = vst [vmem:[#allocation8 + $0x2c] sm:$0x1] %v1235
    %1254 = vst [vmem:[#allocation8 + $0x34] sm:$0x1] %v1237
    %1255 = vst [vmem:[#allocation8 + $0x3c] sm:$0x1] %v1239
    %s1256 = scalar_lea.vmem %s0, 40
    %v1257 = vld [vmem:[%s1256] sm:$0xff]
    %1258 = vset.pattern.permute.xlu0 0
    %1259 = vperm.xlu0 %1258, %v1257
    %v1260 = vpop.permute.xlu0 %1259
    %vm1261 = vcmp.eq.s32.totalorder %v1260, %v113
    %v1262 = vsel %vm1261, 1.0, 0.0
    %v1263 = vpack.c.bf16 %v1262, %v1262
    %1264 = vmatprep.subr.bf16.mxu0 0
    %1265 = vmatpush1.bf16.msra.mxu0 %v155
    %1266 = vmatprep.subr.bf16.mxu0 0
    %1267 = vmatpush1.bf16.msra.mxu0 %v156
    %1268 = vmatprep.subr.bf16.mxu0 0
    %1269 = vmatpush1.bf16.msra.mxu0 %v157
    %1270 = vmatprep.subr.bf16.mxu0 0
    %1271 = vmatpush1.bf16.msra.mxu0 %v158
    %1272 = vmatprep.subr.bf16.mxu0 0
    %1273 = vmatpush1.bf16.msra.mxu0 %v159
    %1274 = vmatprep.subr.bf16.mxu0 0
    %1275 = vmatpush1.bf16.msra.mxu0 %v160
    %1276 = vmatprep.subr.bf16.mxu0 0
    %1277 = vmatpush1.bf16.msra.mxu0 %v161
    %1278 = vmatprep.subr.bf16.mxu0 0
    %1279 = vmatpush1.bf16.msra.mxu0 %v162
    %1280 = vmatprep.subr.bf16.mxu0 0
    %1281 = vmatpush1.bf16.msra.mxu0 0
    %1282 = vmatprep.subr.bf16.mxu0 0
    %1283 = vmatpush1.bf16.msra.mxu0 0
    %1284 = vmatprep.subr.bf16.mxu0 0
    %1285 = vmatpush1.bf16.msra.mxu0 0
    %1286 = vmatprep.subr.bf16.mxu0 0
    %1287 = vmatpush1.bf16.msra.mxu0 0
    %1288 = vmatprep.subr.bf16.mxu0 0
    %1289 = vmatpush1.bf16.msra.mxu0 0
    %1290 = vmatprep.subr.bf16.mxu0 0
    %1291 = vmatpush1.bf16.msra.mxu0 0
    %1292 = vmatprep.subr.bf16.mxu0 0
    %1293 = vmatpush1.bf16.msra.mxu0 0
    %1294 = vmatprep.subr.bf16.mxu0 0
    %1295 = vmatpush1.bf16.msra.mxu0 0
    %1296 = vmatprep.mubr.bf16.mxu0 0
    %1297 = vmatmul.mubr.bf16.gmra.mrb[0].mxu0 %v1149
    %v1298 = vpop.f32.mrb[0].mxu0
    %v1299 = vadd.f32 0.0, %v1298
    %v1300 = vpop.f32.mrb[0].mxu0
    %v1301 = vpop.f32.mrb[0].mxu0
    %v1302 = vpop.f32.mrb[0].mxu0
    %1303 = vdwg.mxu0
    %1304 = vmatprep.subr.bf16.mxu0 0
    %1305 = vmatpush1.bf16.msra.mxu0 %v243
    %1306 = vmatprep.subr.bf16.mxu0 0
    %1307 = vmatpush1.bf16.msra.mxu0 %v244
    %1308 = vmatprep.subr.bf16.mxu0 0
    %1309 = vmatpush1.bf16.msra.mxu0 %v245
    %1310 = vmatprep.subr.bf16.mxu0 0
    %1311 = vmatpush1.bf16.msra.mxu0 %v246
    %1312 = vmatprep.subr.bf16.mxu0 0
    %1313 = vmatpush1.bf16.msra.mxu0 %v247
    %1314 = vmatprep.subr.bf16.mxu0 0
    %1315 = vmatpush1.bf16.msra.mxu0 %v248
    %1316 = vmatprep.subr.bf16.mxu0 0
    %1317 = vmatpush1.bf16.msra.mxu0 %v249
    %1318 = vmatprep.subr.bf16.mxu0 0
    %1319 = vmatpush1.bf16.msra.mxu0 %v250
    %1320 = vmatprep.subr.bf16.mxu0 0
    %1321 = vmatpush1.bf16.msra.mxu0 0
    %1322 = vmatprep.subr.bf16.mxu0 0
    %1323 = vmatpush1.bf16.msra.mxu0 0
    %1324 = vmatprep.subr.bf16.mxu0 0
    %1325 = vmatpush1.bf16.msra.mxu0 0
    %1326 = vmatprep.subr.bf16.mxu0 0
    %1327 = vmatpush1.bf16.msra.mxu0 0
    %1328 = vmatprep.subr.bf16.mxu0 0
    %1329 = vmatpush1.bf16.msra.mxu0 0
    %1330 = vmatprep.subr.bf16.mxu0 0
    %1331 = vmatpush1.bf16.msra.mxu0 0
    %1332 = vmatprep.subr.bf16.mxu0 0
    %1333 = vmatpush1.bf16.msra.mxu0 0
    %1334 = vmatprep.subr.bf16.mxu0 0
    %1335 = vmatpush1.bf16.msra.mxu0 0
    %1336 = vmatprep.mubr.bf16.mxu0 0
    %1337 = vmatmul.mubr.bf16.gmra.mrb[0].mxu0 %v1263
    %v1338 = vpop.f32.mrb[0].mxu0
    %v1339 = vadd.f32 %v1299, %v1338
    %v1340 = vpop.f32.mrb[0].mxu0
    %v1341 = vpop.f32.mrb[0].mxu0
    %v1342 = vpop.f32.mrb[0].mxu0
    %1343 = vdwg.mxu0
    %v1344 = vadd.f32 %v1339, %v303
    %v1345 = vtanh.pop %v1344
    %v1346 = vpack.c.bf16 %v1345, %v1345
    %1347 = vmatprep.subr.bf16.mxu0 0
    %1348 = vmatpush1.bf16.msra.mxu0 %v346
    %1349 = vmatprep.subr.bf16.mxu0 0
    %1350 = vmatpush1.bf16.msra.mxu0 %v347
    %1351 = vmatprep.subr.bf16.mxu0 0
    %1352 = vmatpush1.bf16.msra.mxu0 %v348
    %1353 = vmatprep.subr.bf16.mxu0 0
    %1354 = vmatpush1.bf16.msra.mxu0 %v349
    %1355 = vmatprep.subr.bf16.mxu0 0
    %1356 = vmatpush1.bf16.msra.mxu0 %v350
    %1357 = vmatprep.subr.bf16.mxu0 0
    %1358 = vmatpush1.bf16.msra.mxu0 %v351
    %1359 = vmatprep.subr.bf16.mxu0 0
    %1360 = vmatpush1.bf16.msra.mxu0 %v352
    %1361 = vmatprep.subr.bf16.mxu0 0
    %1362 = vmatpush1.bf16.msra.mxu0 %v353
    %1363 = vmatprep.subr.bf16.mxu0 0
    %1364 = vmatpush1.bf16.msra.mxu0 0
    %1365 = vmatprep.subr.bf16.mxu0 0
    %1366 = vmatpush1.bf16.msra.mxu0 0
    %1367 = vmatprep.subr.bf16.mxu0 0
    %1368 = vmatpush1.bf16.msra.mxu0 0
    %1369 = vmatprep.subr.bf16.mxu0 0
    %1370 = vmatpush1.bf16.msra.mxu0 0
    %1371 = vmatprep.subr.bf16.mxu0 0
    %1372 = vmatpush1.bf16.msra.mxu0 0
    %1373 = vmatprep.subr.bf16.mxu0 0
    %1374 = vmatpush1.bf16.msra.mxu0 0
    %1375 = vmatprep.subr.bf16.mxu0 0
    %1376 = vmatpush1.bf16.msra.mxu0 0
    %1377 = vmatprep.subr.bf16.mxu0 0
    %1378 = vmatpush1.bf16.msra.mxu0 0
    %1379 = vmatprep.mubr.bf16.mxu0 0
    %1380 = vmatmul.mubr.bf16.gmra.mrb[0].mxu0 %v1346
    %v1381 = vpop.f32.mrb[0].mxu0
    %v1382 = vadd.f32 %v312, %v1381
    %v1383 = vpop.f32.mrb[0].mxu0
    %v1384 = vpop.f32.mrb[0].mxu0
    %v1385 = vpop.f32.mrb[0].mxu0
    %1386 = vdwg.mxu0
    %v1388 = vcombine.high %v1382, %v1382
    %v1390 = vunpack.c.l.s4 1966171168
    %v1391 = vunpack.c.0.s8 %v1390
    %v1392 = vlaneseq
    %v1393 = vshrl.u32 %v1392, 7
    %v1394 = vsub.s32 %v1391, %v1393
    %v1395 = vrot.slane %v1382, %v1394
    %v1397 = vunpack.c.l.s4 1966171168
    %v1398 = vunpack.c.0.s8 %v1397
    %v1399 = vlaneseq
    %v1400 = vshrl.u32 %v1399, 7
    %v1401 = vsub.s32 %v1398, %v1400
    %v1402 = vrot.slane %v1388, %v1401
    %v1403 = vcombine.high %v1395, %v1395
    %v1404 = vcombine.high %v1402, %v1402
    %v1406 = vunpack.c.l.s4 1966171168
    %v1407 = vunpack.c.0.s8 %v1406
    %v1408 = vlaneseq
    %v1409 = vshrl.u32 %v1408, 7
    %v1410 = vsub.s32 %v1407, %v1409
    %v1411 = vrot.slane %v1395, %v1410
    %v1413 = vunpack.c.l.s4 1966171168
    %v1414 = vunpack.c.0.s8 %v1413
    %v1415 = vlaneseq
    %v1416 = vshrl.u32 %v1415, 7
    %v1417 = vsub.s32 %v1414, %v1416
    %v1418 = vrot.slane %v1402, %v1417
    %v1420 = vunpack.c.l.s4 1966171168
    %v1421 = vunpack.c.0.s8 %v1420
    %v1422 = vlaneseq
    %v1423 = vshrl.u32 %v1422, 7
    %v1424 = vsub.s32 %v1421, %v1423
    %v1425 = vrot.slane %v1403, %v1424
    %v1427 = vunpack.c.l.s4 1966171168
    %v1428 = vunpack.c.0.s8 %v1427
    %v1429 = vlaneseq
    %v1430 = vshrl.u32 %v1429, 7
    %v1431 = vsub.s32 %v1428, %v1430
    %v1432 = vrot.slane %v1404, %v1431
    %v1433 = vcombine.high %v1411, %v1411
    %v1434 = vcombine.high %v1418, %v1418
    %v1435 = vcombine.high %v1425, %v1425
    %v1436 = vcombine.high %v1432, %v1432
    %1445 = vst [vmem:[#allocation8 + $0x5] sm:$0x1] %v1411
    %1446 = vst [vmem:[#allocation8 + $0xd] sm:$0x1] %v1425
    %1447 = vst [vmem:[#allocation8 + $0x15] sm:$0x1] %v1433
    %1448 = vst [vmem:[#allocation8 + $0x1d] sm:$0x1] %v1435
    %1449 = vst [vmem:[#allocation8 + $0x25] sm:$0x1] %v1418
    %1450 = vst [vmem:[#allocation8 + $0x2d] sm:$0x1] %v1432
    %1451 = vst [vmem:[#allocation8 + $0x35] sm:$0x1] %v1434
    %1452 = vst [vmem:[#allocation8 + $0x3d] sm:$0x1] %v1436
    %s1453 = scalar_lea.vmem %s0, 48
    %v1454 = vld [vmem:[%s1453] sm:$0xff]
    %1455 = vset.pattern.permute.xlu0 0
    %1456 = vperm.xlu0 %1455, %v1454
    %v1457 = vpop.permute.xlu0 %1456
    %vm1458 = vcmp.eq.s32.totalorder %v1457, %v113
    %v1459 = vsel %vm1458, 1.0, 0.0
    %v1460 = vpack.c.bf16 %v1459, %v1459
    %1461 = vmatprep.subr.bf16.mxu0 0
    %1462 = vmatpush1.bf16.msra.mxu0 %v155
    %1463 = vmatprep.subr.bf16.mxu0 0
    %1464 = vmatpush1.bf16.msra.mxu0 %v156
    %1465 = vmatprep.subr.bf16.mxu0 0
    %1466 = vmatpush1.bf16.msra.mxu0 %v157
    %1467 = vmatprep.subr.bf16.mxu0 0
    %1468 = vmatpush1.bf16.msra.mxu0 %v158
    %1469 = vmatprep.subr.bf16.mxu0 0
    %1470 = vmatpush1.bf16.msra.mxu0 %v159
    %1471 = vmatprep.subr.bf16.mxu0 0
    %1472 = vmatpush1.bf16.msra.mxu0 %v160
    %1473 = vmatprep.subr.bf16.mxu0 0
    %1474 = vmatpush1.bf16.msra.mxu0 %v161
    %1475 = vmatprep.subr.bf16.mxu0 0
    %1476 = vmatpush1.bf16.msra.mxu0 %v162
    %1477 = vmatprep.subr.bf16.mxu0 0
    %1478 = vmatpush1.bf16.msra.mxu0 0
    %1479 = vmatprep.subr.bf16.mxu0 0
    %1480 = vmatpush1.bf16.msra.mxu0 0
    %1481 = vmatprep.subr.bf16.mxu0 0
    %1482 = vmatpush1.bf16.msra.mxu0 0
    %1483 = vmatprep.subr.bf16.mxu0 0
    %1484 = vmatpush1.bf16.msra.mxu0 0
    %1485 = vmatprep.subr.bf16.mxu0 0
    %1486 = vmatpush1.bf16.msra.mxu0 0
    %1487 = vmatprep.subr.bf16.mxu0 0
    %1488 = vmatpush1.bf16.msra.mxu0 0
    %1489 = vmatprep.subr.bf16.mxu0 0
    %1490 = vmatpush1.bf16.msra.mxu0 0
    %1491 = vmatprep.subr.bf16.mxu0 0
    %1492 = vmatpush1.bf16.msra.mxu0 0
    %1493 = vmatprep.mubr.bf16.mxu0 0
    %1494 = vmatmul.mubr.bf16.gmra.mrb[0].mxu0 %v1346
    %v1495 = vpop.f32.mrb[0].mxu0
    %v1496 = vadd.f32 0.0, %v1495
    %v1497 = vpop.f32.mrb[0].mxu0
    %v1498 = vpop.f32.mrb[0].mxu0
    %v1499 = vpop.f32.mrb[0].mxu0
    %1500 = vdwg.mxu0
    %1501 = vmatprep.subr.bf16.mxu0 0
    %1502 = vmatpush1.bf16.msra.mxu0 %v243
    %1503 = vmatprep.subr.bf16.mxu0 0
    %1504 = vmatpush1.bf16.msra.mxu0 %v244
    %1505 = vmatprep.subr.bf16.mxu0 0
    %1506 = vmatpush1.bf16.msra.mxu0 %v245
    %1507 = vmatprep.subr.bf16.mxu0 0
    %1508 = vmatpush1.bf16.msra.mxu0 %v246
    %1509 = vmatprep.subr.bf16.mxu0 0
    %1510 = vmatpush1.bf16.msra.mxu0 %v247
    %1511 = vmatprep.subr.bf16.mxu0 0
    %1512 = vmatpush1.bf16.msra.mxu0 %v248
    %1513 = vmatprep.subr.bf16.mxu0 0
    %1514 = vmatpush1.bf16.msra.mxu0 %v249
    %1515 = vmatprep.subr.bf16.mxu0 0
    %1516 = vmatpush1.bf16.msra.mxu0 %v250
    %1517 = vmatprep.subr.bf16.mxu0 0
    %1518 = vmatpush1.bf16.msra.mxu0 0
    %1519 = vmatprep.subr.bf16.mxu0 0
    %1520 = vmatpush1.bf16.msra.mxu0 0
    %1521 = vmatprep.subr.bf16.mxu0 0
    %1522 = vmatpush1.bf16.msra.mxu0 0
    %1523 = vmatprep.subr.bf16.mxu0 0
    %1524 = vmatpush1.bf16.msra.mxu0 0
    %1525 = vmatprep.subr.bf16.mxu0 0
    %1526 = vmatpush1.bf16.msra.mxu0 0
    %1527 = vmatprep.subr.bf16.mxu0 0
    %1528 = vmatpush1.bf16.msra.mxu0 0
    %1529 = vmatprep.subr.bf16.mxu0 0
    %1530 = vmatpush1.bf16.msra.mxu0 0
    %1531 = vmatprep.subr.bf16.mxu0 0
    %1532 = vmatpush1.bf16.msra.mxu0 0
    %1533 = vmatprep.mubr.bf16.mxu0 0
    %1534 = vmatmul.mubr.bf16.gmra.mrb[0].mxu0 %v1460
    %v1535 = vpop.f32.mrb[0].mxu0
    %v1536 = vadd.f32 %v1496, %v1535
    %v1537 = vpop.f32.mrb[0].mxu0
    %v1538 = vpop.f32.mrb[0].mxu0
    %v1539 = vpop.f32.mrb[0].mxu0
    %1540 = vdwg.mxu0
    %v1541 = vadd.f32 %v1536, %v303
    %v1542 = vtanh.pop %v1541
    %v1543 = vpack.c.bf16 %v1542, %v1542
    %1544 = vmatprep.subr.bf16.mxu0 0
    %1545 = vmatpush1.bf16.msra.mxu0 %v346
    %1546 = vmatprep.subr.bf16.mxu0 0
    %1547 = vmatpush1.bf16.msra.mxu0 %v347
    %1548 = vmatprep.subr.bf16.mxu0 0
    %1549 = vmatpush1.bf16.msra.mxu0 %v348
    %1550 = vmatprep.subr.bf16.mxu0 0
    %1551 = vmatpush1.bf16.msra.mxu0 %v349
    %1552 = vmatprep.subr.bf16.mxu0 0
    %1553 = vmatpush1.bf16.msra.mxu0 %v350
    %1554 = vmatprep.subr.bf16.mxu0 0
    %1555 = vmatpush1.bf16.msra.mxu0 %v351
    %1556 = vmatprep.subr.bf16.mxu0 0
    %1557 = vmatpush1.bf16.msra.mxu0 %v352
    %1558 = vmatprep.subr.bf16.mxu0 0
    %1559 = vmatpush1.bf16.msra.mxu0 %v353
    %1560 = vmatprep.subr.bf16.mxu0 0
    %1561 = vmatpush1.bf16.msra.mxu0 0
    %1562 = vmatprep.subr.bf16.mxu0 0
    %1563 = vmatpush1.bf16.msra.mxu0 0
    %1564 = vmatprep.subr.bf16.mxu0 0
    %1565 = vmatpush1.bf16.msra.mxu0 0
    %1566 = vmatprep.subr.bf16.mxu0 0
    %1567 = vmatpush1.bf16.msra.mxu0 0
    %1568 = vmatprep.subr.bf16.mxu0 0
    %1569 = vmatpush1.bf16.msra.mxu0 0
    %1570 = vmatprep.subr.bf16.mxu0 0
    %1571 = vmatpush1.bf16.msra.mxu0 0
    %1572 = vmatprep.subr.bf16.mxu0 0
    %1573 = vmatpush1.bf16.msra.mxu0 0
    %1574 = vmatprep.subr.bf16.mxu0 0
    %1575 = vmatpush1.bf16.msra.mxu0 0
    %1576 = vmatprep.mubr.bf16.mxu0 0
    %1577 = vmatmul.mubr.bf16.gmra.mrb[0].mxu0 %v1543
    %v1578 = vpop.f32.mrb[0].mxu0
    %v1579 = vadd.f32 %v312, %v1578
    %v1580 = vpop.f32.mrb[0].mxu0
    %v1581 = vpop.f32.mrb[0].mxu0
    %v1582 = vpop.f32.mrb[0].mxu0
    %1583 = vdwg.mxu0
    %v1585 = vcombine.high %v1579, %v1579
    %v1587 = vunpack.c.l.s4 1966171168
    %v1588 = vunpack.c.0.s8 %v1587
    %v1589 = vlaneseq
    %v1590 = vshrl.u32 %v1589, 7
    %v1591 = vsub.s32 %v1588, %v1590
    %v1592 = vrot.slane %v1579, %v1591
    %v1594 = vunpack.c.l.s4 1966171168
    %v1595 = vunpack.c.0.s8 %v1594
    %v1596 = vlaneseq
    %v1597 = vshrl.u32 %v1596, 7
    %v1598 = vsub.s32 %v1595, %v1597
    %v1599 = vrot.slane %v1585, %v1598
    %v1600 = vcombine.high %v1592, %v1592
    %v1601 = vcombine.high %v1599, %v1599
    %v1603 = vunpack.c.l.s4 1966171168
    %v1604 = vunpack.c.0.s8 %v1603
    %v1605 = vlaneseq
    %v1606 = vshrl.u32 %v1605, 7
    %v1607 = vsub.s32 %v1604, %v1606
    %v1608 = vrot.slane %v1592, %v1607
    %v1610 = vunpack.c.l.s4 1966171168
    %v1611 = vunpack.c.0.s8 %v1610
    %v1612 = vlaneseq
    %v1613 = vshrl.u32 %v1612, 7
    %v1614 = vsub.s32 %v1611, %v1613
    %v1615 = vrot.slane %v1599, %v1614
    %v1617 = vunpack.c.l.s4 1966171168
    %v1618 = vunpack.c.0.s8 %v1617
    %v1619 = vlaneseq
    %v1620 = vshrl.u32 %v1619, 7
    %v1621 = vsub.s32 %v1618, %v1620
    %v1622 = vrot.slane %v1600, %v1621
    %v1624 = vunpack.c.l.s4 1966171168
    %v1625 = vunpack.c.0.s8 %v1624
    %v1626 = vlaneseq
    %v1627 = vshrl.u32 %v1626, 7
    %v1628 = vsub.s32 %v1625, %v1627
    %v1629 = vrot.slane %v1601, %v1628
    %v1630 = vcombine.high %v1608, %v1608
    %v1631 = vcombine.high %v1615, %v1615
    %v1632 = vcombine.high %v1622, %v1622
    %v1633 = vcombine.high %v1629, %v1629
    %1642 = vst [vmem:[#allocation8 + $0x6] sm:$0x1] %v1608
    %1643 = vst [vmem:[#allocation8 + $0xe] sm:$0x1] %v1622
    %1644 = vst [vmem:[#allocation8 + $0x16] sm:$0x1] %v1630
    %1645 = vst [vmem:[#allocation8 + $0x1e] sm:$0x1] %v1632
    %1646 = vst [vmem:[#allocation8 + $0x26] sm:$0x1] %v1615
    %1647 = vst [vmem:[#allocation8 + $0x2e] sm:$0x1] %v1629
    %1648 = vst [vmem:[#allocation8 + $0x36] sm:$0x1] %v1631
    %1649 = vst [vmem:[#allocation8 + $0x3e] sm:$0x1] %v1633
    %s1650 = scalar_lea.vmem %s0, 56
    %v1651 = vld [vmem:[%s1650] sm:$0xff]
    %1652 = vset.pattern.permute.xlu0 0
    %1653 = vperm.xlu0 %1652, %v1651
    %v1654 = vpop.permute.xlu0 %1653
    %vm1655 = vcmp.eq.s32.totalorder %v1654, %v113
    %v1656 = vsel %vm1655, 1.0, 0.0
    %v1657 = vpack.c.bf16 %v1656, %v1656
    %1658 = vmatprep.subr.bf16.mxu0 0
    %1659 = vmatpush1.bf16.msra.mxu0 %v155
    %1660 = vmatprep.subr.bf16.mxu0 0
    %1661 = vmatpush1.bf16.msra.mxu0 %v156
    %1662 = vmatprep.subr.bf16.mxu0 0
    %1663 = vmatpush1.bf16.msra.mxu0 %v157
    %1664 = vmatprep.subr.bf16.mxu0 0
    %1665 = vmatpush1.bf16.msra.mxu0 %v158
    %1666 = vmatprep.subr.bf16.mxu0 0
    %1667 = vmatpush1.bf16.msra.mxu0 %v159
    %1668 = vmatprep.subr.bf16.mxu0 0
    %1669 = vmatpush1.bf16.msra.mxu0 %v160
    %1670 = vmatprep.subr.bf16.mxu0 0
    %1671 = vmatpush1.bf16.msra.mxu0 %v161
    %1672 = vmatprep.subr.bf16.mxu0 0
    %1673 = vmatpush1.bf16.msra.mxu0 %v162
    %1674 = vmatprep.subr.bf16.mxu0 0
    %1675 = vmatpush1.bf16.msra.mxu0 0
    %1676 = vmatprep.subr.bf16.mxu0 0
    %1677 = vmatpush1.bf16.msra.mxu0 0
    %1678 = vmatprep.subr.bf16.mxu0 0
    %1679 = vmatpush1.bf16.msra.mxu0 0
    %1680 = vmatprep.subr.bf16.mxu0 0
    %1681 = vmatpush1.bf16.msra.mxu0 0
    %1682 = vmatprep.subr.bf16.mxu0 0
    %1683 = vmatpush1.bf16.msra.mxu0 0
    %1684 = vmatprep.subr.bf16.mxu0 0
    %1685 = vmatpush1.bf16.msra.mxu0 0
    %1686 = vmatprep.subr.bf16.mxu0 0
    %1687 = vmatpush1.bf16.msra.mxu0 0
    %1688 = vmatprep.subr.bf16.mxu0 0
    %1689 = vmatpush1.bf16.msra.mxu0 0
    %1690 = vmatprep.mubr.bf16.mxu0 0
    %1691 = vmatmul.mubr.bf16.gmra.mrb[0].mxu0 %v1543
    %v1692 = vpop.f32.mrb[0].mxu0
    %v1693 = vadd.f32 0.0, %v1692
    %v1694 = vpop.f32.mrb[0].mxu0
    %v1695 = vpop.f32.mrb[0].mxu0
    %v1696 = vpop.f32.mrb[0].mxu0
    %1697 = vdwg.mxu0
    %1698 = vmatprep.subr.bf16.mxu0 0
    %1699 = vmatpush1.bf16.msra.mxu0 %v243
    %1700 = vmatprep.subr.bf16.mxu0 0
    %1701 = vmatpush1.bf16.msra.mxu0 %v244
    %1702 = vmatprep.subr.bf16.mxu0 0
    %1703 = vmatpush1.bf16.msra.mxu0 %v245
    %1704 = vmatprep.subr.bf16.mxu0 0
    %1705 = vmatpush1.bf16.msra.mxu0 %v246
    %1706 = vmatprep.subr.bf16.mxu0 0
    %1707 = vmatpush1.bf16.msra.mxu0 %v247
    %1708 = vmatprep.subr.bf16.mxu0 0
    %1709 = vmatpush1.bf16.msra.mxu0 %v248
    %1710 = vmatprep.subr.bf16.mxu0 0
    %1711 = vmatpush1.bf16.msra.mxu0 %v249
    %1712 = vmatprep.subr.bf16.mxu0 0
    %1713 = vmatpush1.bf16.msra.mxu0 %v250
    %1714 = vmatprep.subr.bf16.mxu0 0
    %1715 = vmatpush1.bf16.msra.mxu0 0
    %1716 = vmatprep.subr.bf16.mxu0 0
    %1717 = vmatpush1.bf16.msra.mxu0 0
    %1718 = vmatprep.subr.bf16.mxu0 0
    %1719 = vmatpush1.bf16.msra.mxu0 0
    %1720 = vmatprep.subr.bf16.mxu0 0
    %1721 = vmatpush1.bf16.msra.mxu0 0
    %1722 = vmatprep.subr.bf16.mxu0 0
    %1723 = vmatpush1.bf16.msra.mxu0 0
    %1724 = vmatprep.subr.bf16.mxu0 0
    %1725 = vmatpush1.bf16.msra.mxu0 0
    %1726 = vmatprep.subr.bf16.mxu0 0
    %1727 = vmatpush1.bf16.msra.mxu0 0
    %1728 = vmatprep.subr.bf16.mxu0 0
    %1729 = vmatpush1.bf16.msra.mxu0 0
    %1730 = vmatprep.mubr.bf16.mxu0 0
    %1731 = vmatmul.mubr.bf16.gmra.mrb[0].mxu0 %v1657
    %v1732 = vpop.f32.mrb[0].mxu0
    %v1733 = vadd.f32 %v1693, %v1732
    %v1734 = vpop.f32.mrb[0].mxu0
    %v1735 = vpop.f32.mrb[0].mxu0
    %v1736 = vpop.f32.mrb[0].mxu0
    %1737 = vdwg.mxu0
    %v1738 = vadd.f32 %v1733, %v303
    %v1739 = vtanh.pop %v1738
    %v1740 = vpack.c.bf16 %v1739, %v1739
    %1741 = vmatprep.subr.bf16.mxu0 0
    %1742 = vmatpush1.bf16.msra.mxu0 %v346
    %1743 = vmatprep.subr.bf16.mxu0 0
    %1744 = vmatpush1.bf16.msra.mxu0 %v347
    %1745 = vmatprep.subr.bf16.mxu0 0
    %1746 = vmatpush1.bf16.msra.mxu0 %v348
    %1747 = vmatprep.subr.bf16.mxu0 0
    %1748 = vmatpush1.bf16.msra.mxu0 %v349
    %1749 = vmatprep.subr.bf16.mxu0 0
    %1750 = vmatpush1.bf16.msra.mxu0 %v350
    %1751 = vmatprep.subr.bf16.mxu0 0
    %1752 = vmatpush1.bf16.msra.mxu0 %v351
    %1753 = vmatprep.subr.bf16.mxu0 0
    %1754 = vmatpush1.bf16.msra.mxu0 %v352
    %1755 = vmatprep.subr.bf16.mxu0 0
    %1756 = vmatpush1.bf16.msra.mxu0 %v353
    %1757 = vmatprep.subr.bf16.mxu0 0
    %1758 = vmatpush1.bf16.msra.mxu0 0
    %1759 = vmatprep.subr.bf16.mxu0 0
    %1760 = vmatpush1.bf16.msra.mxu0 0
    %1761 = vmatprep.subr.bf16.mxu0 0
    %1762 = vmatpush1.bf16.msra.mxu0 0
    %1763 = vmatprep.subr.bf16.mxu0 0
    %1764 = vmatpush1.bf16.msra.mxu0 0
    %1765 = vmatprep.subr.bf16.mxu0 0
    %1766 = vmatpush1.bf16.msra.mxu0 0
    %1767 = vmatprep.subr.bf16.mxu0 0
    %1768 = vmatpush1.bf16.msra.mxu0 0
    %1769 = vmatprep.subr.bf16.mxu0 0
    %1770 = vmatpush1.bf16.msra.mxu0 0
    %1771 = vmatprep.subr.bf16.mxu0 0
    %1772 = vmatpush1.bf16.msra.mxu0 0
    %1773 = vmatprep.mubr.bf16.mxu0 0
    %1774 = vmatmul.mubr.bf16.gmra.mrb[0].mxu0 %v1740
    %v1775 = vpop.f32.mrb[0].mxu0
    %v1776 = vadd.f32 %v312, %v1775
    %v1777 = vpop.f32.mrb[0].mxu0
    %v1778 = vpop.f32.mrb[0].mxu0
    %v1779 = vpop.f32.mrb[0].mxu0
    %1780 = vdwg.mxu0
    %v1782 = vcombine.high %v1776, %v1776
    %v1784 = vunpack.c.l.s4 1966171168
    %v1785 = vunpack.c.0.s8 %v1784
    %v1786 = vlaneseq
    %v1787 = vshrl.u32 %v1786, 7
    %v1788 = vsub.s32 %v1785, %v1787
    %v1789 = vrot.slane %v1776, %v1788
    %v1791 = vunpack.c.l.s4 1966171168
    %v1792 = vunpack.c.0.s8 %v1791
    %v1793 = vlaneseq
    %v1794 = vshrl.u32 %v1793, 7
    %v1795 = vsub.s32 %v1792, %v1794
    %v1796 = vrot.slane %v1782, %v1795
    %v1797 = vcombine.high %v1789, %v1789
    %v1798 = vcombine.high %v1796, %v1796
    %v1800 = vunpack.c.l.s4 1966171168
    %v1801 = vunpack.c.0.s8 %v1800
    %v1802 = vlaneseq
    %v1803 = vshrl.u32 %v1802, 7
    %v1804 = vsub.s32 %v1801, %v1803
    %v1805 = vrot.slane %v1789, %v1804
    %v1807 = vunpack.c.l.s4 1966171168
    %v1808 = vunpack.c.0.s8 %v1807
    %v1809 = vlaneseq
    %v1810 = vshrl.u32 %v1809, 7
    %v1811 = vsub.s32 %v1808, %v1810
    %v1812 = vrot.slane %v1796, %v1811
    %v1814 = vunpack.c.l.s4 1966171168
    %v1815 = vunpack.c.0.s8 %v1814
    %v1816 = vlaneseq
    %v1817 = vshrl.u32 %v1816, 7
    %v1818 = vsub.s32 %v1815, %v1817
    %v1819 = vrot.slane %v1797, %v1818
    %v1821 = vunpack.c.l.s4 1966171168
    %v1822 = vunpack.c.0.s8 %v1821
    %v1823 = vlaneseq
    %v1824 = vshrl.u32 %v1823, 7
    %v1825 = vsub.s32 %v1822, %v1824
    %v1826 = vrot.slane %v1798, %v1825
    %v1827 = vcombine.high %v1805, %v1805
    %v1828 = vcombine.high %v1812, %v1812
    %v1829 = vcombine.high %v1819, %v1819
    %v1830 = vcombine.high %v1826, %v1826
    %1839 = vst [vmem:[#allocation8 + $0x7] sm:$0x1] %v1805
    %1840 = vst [vmem:[#allocation8 + $0xf] sm:$0x1] %v1819
    %1841 = vst [vmem:[#allocation8 + $0x17] sm:$0x1] %v1827
    %1842 = vst [vmem:[#allocation8 + $0x1f] sm:$0x1] %v1829
    %1843 = vst [vmem:[#allocation8 + $0x27] sm:$0x1] %v1812
    %1844 = vst [vmem:[#allocation8 + $0x2f] sm:$0x1] %v1826
    %1845 = vst [vmem:[#allocation8 + $0x37] sm:$0x1] %v1828
    %1846 = vst [vmem:[#allocation8 + $0x3f] sm:$0x1] %v1830
    %1847 = vst [vmem:[#allocation2] sm:$0xff] %v1739
    // Predicated region
    $region42: #{tpu_custom_call.1} parent=1 // pred_check
      _
    $region43: #{tpu_custom_call.1} parent=1 // pred_check_branch
      %1849 = sbr.rel (0) target = $region45
    $region44: #{tpu_custom_call.1} parent=1 // pred_region
      %s1851 = ssub.s32 1024, 1024
      %1852 = vsyncadd [#allocation5], %s1851
      %s1853 = sshll.u32 [#allocation8], 4
      %s1854 = int_to_ptr.vmem [resolvable:$true] %s1853
      %1859 = dma.vmem_to_hbm [thread:$0]  %s1854, 1024, %s7, [#allocation5], 128, 128, 8
    $region45: #{tpu_custom_call.1} parent=1 // pred_fallthru
      _
    // Predicated region
    $region46: #{tpu_custom_call.1} parent=1 // pred_check
      _
    $region47: #{tpu_custom_call.1} parent=1 // pred_check_branch
      %1861 = sbr.rel (0) target = $region49
    $region48: #{tpu_custom_call.1} parent=1 // pred_region
      %1862 = dma.done [#allocation5], 1024
    $region49: #{tpu_custom_call.1} parent=1 // pred_fallthru
      _
    %1863 = vsyncpa [#allocation4], 1
    %1864 = vsyncpa [#allocation7], 1
    %1865 = vsyncpa [#allocation5], 1

</llo_original>
